<compile_context>
chip_gen: v5e
topology: v5e:2x2
jax: 0.10.0
libtpu: 0.0.40
codegen_flags: <defaults>
</compile_context>

<pallas_src>
import functools

import jax
import jax.numpy as jnp
import numpy as np
from jax import lax
from jax.experimental import pallas as pl
from jax.experimental.pallas import tpu as pltpu

H = 10    # rnn_hidden, matches RNN(rnn_in=2, rnn_hidden=10, ffn_sizes=[10, 1])
HP = 16   # padded hidden size (aligned sublanes); extra rows/cols are zero

_STATIC_UNROLL_MAX = 64   # full static unroll (+ batched stores) below this


class _RowWriter:
  """Accumulates (1, BT) rows and flushes them as dense (<=8, BT) stores."""

  def __init__(self, ref):
    self._ref, self._rows, self._base = ref, [], 0

  def append(self, row):
    self._rows.append(row)
    if len(self._rows) == 8:
      self.flush()

  def flush(self):
    if not self._rows:
      return
    k = len(self._rows)
    blk = self._rows[0] if k == 1 else jnp.concatenate(self._rows, axis=0)
    self._ref[self._base:self._base + k, :] = blk
    self._base += k
    self._rows = []


def _deep_hedging_kernel(
    x_ref,      # (N,  BT) fine-grid prices, time-major (batch tile on lanes)
    x0_ref,     # (1,  BT) initial prices
    thr_ref,    # (N,  1)  folded barrier threshold (theta0/theta)*e^{(r_bD-r_cE)t}
    cf_ref,     # (NC, 2)  per-coarse-step payoff factors [e^{r_cE t}, theta0*e^{r_bD t}]
    scal_ref,   # (NC, 8)  SMEM scalars: [t, 1+r_cD*dt, 1+r_bD*dt, 1+r_cE*dt,
                #          1+r_bE*dt, b_out (row0), pay0 (row0), 0]
    w_ref,      # (HP, 4)  columns: [w_ih[:,0], w_ih[:,1], b_h, w_out]
    whh_ref,    # (HP, HP) RNN recurrent weights (zero-padded)
    v_ref,      # (NC, BT) output: portfolio value
    pay_ref,    # (NC, BT) output: barrier-option payoff
    cost_ref,   # (NC, BT) output: transaction cost
    nl_ref,     # (NC, BT) VMEM scratch: per-step not-liquidated mask (fori path)
    *, lag, n_coarse, gas, v_init):
  f32 = jnp.float32
  BT = x_ref.shape[1]

  # ---- loop-invariant values, hoisted once ----------------------------------
  x0 = x0_ref[...]                      # (1, BT)
  inv_x0 = 1.0 / x0                     # single divide; multiplies in the loop
  wih_t = w_ref[:, 0:1]                 # (HP, 1)
  wih_x = w_ref[:, 1:2]
  bh = w_ref[:, 2:3]
  wout = w_ref[:, 3:4]
  whh = whh_ref[...]                    # (HP, HP)
  bout = scal_ref[0, 5]                 # SMEM scalars
  pay0 = scal_ref[0, 6]

  # ---- fused RNN cell + self-financing update (all (1,BT) / (HP,BT) vregs) ---
  # TODO(synk): exact RNN class from the repo is unavailable; a standard tanh
  # RNN cell + linear head (ffn_sizes=[10, 1]) with input [t, x/x0] is used.
  def cell(h, hedge_prev, v_i, cost_i, p, p_new, nl, t_i, f_cD, f_bD, f_cE, f_bE):
    xn = p * inv_x0                                          # (1, BT)
    rec = jnp.dot(whh, h, preferred_element_type=f32)        # (HP, BT) on MXU
    h_new = jnp.tanh(wih_x * xn + rec + (wih_t * t_i + bh))
    hedge = jnp.sum(wout * h_new, axis=0, keepdims=True) + bout    # (1, BT)
    resid = v_i - hedge * p
    v_new = (f_cD * jnp.maximum(resid, 0.0)
             + f_bD * jnp.minimum(resid, 0.0)
             + (f_cE * jnp.maximum(hedge, 0.0)
                + f_bE * jnp.minimum(hedge, 0.0)) * p_new) * nl
    d = hedge - hedge_prev
    tc = (cost_i + gas * (1.0 - jnp.exp(-10.0 * d * d))) * nl
    return h_new, hedge, v_new, tc

  if n_coarse - 1 <= _STATIC_UNROLL_MAX:
    # ======================= static path (tiny/medium nc) ====================
    # Phase 1: barrier prefix + payoff, dense and OFF the serial critical path.
    pay_w = _RowWriter(pay_ref)
    pay_w.append(jnp.full((1, BT), pay0, f32))               # row 0
    liq = jnp.zeros((1, BT), f32)
    nl_rows = []
    for i in range(n_coarse - 1):
      a, b = i * lag, (i + 1) * lag
      hit = (x_ref[a:b, :] <= thr_ref[a:b, :] * x0).astype(f32)   # (lag, BT)
      liq = jnp.maximum(liq, jnp.max(hit, axis=0, keepdims=True))
      nl = 1.0 - liq
      nl_rows.append(nl)
      e = cf_ref[i + 1:i + 2, :]                             # (1, 2)
      pay_w.append((x_ref[b:b + 1, :] * e[:, 0:1] - x0 * e[:, 1:2]) * nl)
    pay_w.flush()

    # Phase 2: serial RNN + self-financing recursion, rows flushed 8 at a time.
    v_w, c_w = _RowWriter(v_ref), _RowWriter(cost_ref)
    h = jnp.zeros((HP, BT), f32)
    hedge_prev = jnp.zeros((1, BT), f32)
    v_i = jnp.full((1, BT), v_init, f32)
    cost_i = jnp.zeros((1, BT), f32)
    v_w.append(v_i)
    c_w.append(cost_i)
    for i in range(n_coarse - 1):
      p = x_ref[i * lag:i * lag + 1, :]
      p_new = x_ref[(i + 1) * lag:(i + 1) * lag + 1, :]
      h, hedge_prev, v_i, cost_i = cell(
          h, hedge_prev, v_i, cost_i, p, p_new, nl_rows[i],
          scal_ref[i, 0], scal_ref[i, 1], scal_ref[i, 2],
          scal_ref[i, 3], scal_ref[i, 4])
      v_w.append(v_i)
      c_w.append(cost_i)
    v_w.flush()
    c_w.flush()
  else:
    # ================== fori path (large nc, bounded unroll) =================
    v_ref[0:1, :] = jnp.full((1, BT), v_init, f32)
    pay_ref[0:1, :] = jnp.full((1, BT), pay0, f32)
    cost_ref[0:1, :] = jnp.zeros((1, BT), f32)

    def bar_step(i, liq):
      a = pl.multiple_of(i * lag, lag)
      hit = (x_ref[pl.ds(a, lag), :]
             <= thr_ref[pl.ds(a, lag), :] * x0).astype(f32)
      liq = jnp.maximum(liq, jnp.max(hit, axis=0, keepdims=True))
      nl = 1.0 - liq
      nl_ref[pl.ds(i, 1), :] = nl
      e = cf_ref[pl.ds(i + 1, 1), :]
      pay_ref[pl.ds(i + 1, 1), :] = (
          x_ref[pl.ds(a + lag, 1), :] * e[:, 0:1] - x0 * e[:, 1:2]) * nl
      return liq

    lax.fori_loop(0, n_coarse - 1, bar_step, jnp.zeros((1, BT), f32), unroll=2)

    def fin_step(i, carry):
      h, hedge_prev, v_i, cost_i = carry
      a = pl.multiple_of(i * lag, lag)
      p = x_ref[pl.ds(a, 1), :]
      p_new = x_ref[pl.ds(a + lag, 1), :]
      nl = nl_ref[pl.ds(i, 1), :]
      h, hedge, v_new, tc = cell(
          h, hedge_prev, v_i, cost_i, p, p_new, nl,
          scal_ref[i, 0], scal_ref[i, 1], scal_ref[i, 2],
          scal_ref[i, 3], scal_ref[i, 4])
      v_ref[pl.ds(i + 1, 1), :] = v_new
      cost_ref[pl.ds(i + 1, 1), :] = tc
      return (h, hedge, v_new, tc)

    init = (jnp.zeros((HP, BT), f32), jnp.zeros((1, BT), f32),
            jnp.full((1, BT), v_init, f32), jnp.zeros((1, BT), f32))
    lax.fori_loop(0, n_coarse - 1, fin_step, init, unroll=2)


def _pick_tile_and_vmem(B, N, nc, b_tile):
  """Generation-aware batch tile + VMEM limit (v7x: 64 MiB, v5e/v6e: 128 MiB)."""
  rnd = lambda a, m: ((a + m - 1) // m) * m
  try:
    vmem_cap = int(pltpu.get_tpu_info().vmem_capacity_bytes)
  except Exception:
    vmem_cap = 64 << 20                      # conservative (v7x-sized) fallback
  B128 = rnd(max(B, 1), 128)
  if b_tile is None:
    budget = int(0.45 * vmem_cap)
    per_lane = 4 * (2 * N + 7 * nc + 16)     # f32 bytes of VMEM per batch lane
    bt = max(128, min(2048, (budget // max(per_lane, 1)) // 128 * 128))
    bt = min(bt, B128)
    # Keep >= 2 grid tiles when the batch allows it so the "parallel" batch
    # axis can shard across the two v7x TensorCores (no-op on v5e/v6e).
    if B128 >= 256 and B128 // bt < 2:
      bt = max(128, ((B128 // 2) // 128) * 128)
  else:
    bt = min(rnd(b_tile, 128), B128)
  B_pad = rnd(B128, bt)
  need = 4 * (2 * N * bt + 6 * nc * bt + nc * bt + 16 * bt
              + 2 * rnd(N, 8) * 128 + 2 * rnd(nc, 8) * 128 + 4 * HP * 128)
  vmem_limit = int(min(max(int(need * 1.3) + (2 << 20), 4 << 20),
                       int(0.8 * vmem_cap)))
  return bt, B_pad, vmem_limit


def deep_hedging_barrier_forward(ts, lag, x0, x_tm, params, hp, b_tile=None):
  """x_tm: (N, B) fine-grid price paths, TIME-MAJOR (market generator glue
  produces this layout directly — no wrapper-side HBM transpose); x0: (B,).
  Returns (v, payoff, cost), each (B, n_coarse, 1)."""
  f32 = jnp.float32
  B = x0.shape[0]
  N = ts.shape[0]
  nc = len(range(0, N, lag))
  assert nc >= 2 and x_tm.shape == (N, B)

  BT, B_pad, vmem_limit = _pick_tile_and_vmem(B, N, nc, b_tile)

  x_tb = x_tm.astype(f32)
  x0_row = x0.reshape(1, B).astype(f32)
  if B_pad != B:                        # pad lanes with benign finite values
    x_tb = jnp.pad(x_tb, ((0, 0), (0, B_pad - B)), constant_values=1.0)
    x0_row = jnp.pad(x0_row, ((0, 0), (0, B_pad - B)), constant_values=1.0)

  # ---- one-time precompute of per-step scalars / folded factors --------------
  tsf = ts.astype(f32)
  x0f = x0.astype(f32)
  t_c = tsf[::lag]                                                # (NC,)
  dt = t_c[1:] - t_c[:-1]
  w_ih, w_hh, b_h, w_out, b_out = params

  scal = jnp.zeros((nc, 8), f32)                                  # -> SMEM
  scal = scal.at[:, 0].set(t_c)
  scal = scal.at[:nc - 1, 1].set(1.0 + hp['r_cD'] * dt)
  scal = scal.at[:nc - 1, 2].set(1.0 + hp['r_bD'] * dt)
  scal = scal.at[:nc - 1, 3].set(1.0 + hp['r_cE'] * dt)
  scal = scal.at[:nc - 1, 4].set(1.0 + hp['r_bE'] * dt)
  scal = scal.at[0, 5].set(b_out[0])
  scal = scal.at[0, 6].set(x0f[0] * (1.0 - hp['theta0']))

  # folded barrier threshold per FINE step:
  #   theta*x*e^{r_cE t} <= theta0*x0*e^{r_bD t}  <=>  x <= thr(t)*x0
  thr = ((hp['theta0'] / hp['theta'])
         * jnp.exp((hp['r_bD'] - hp['r_cE']) * tsf)).astype(f32).reshape(N, 1)

  # folded payoff factors per COARSE step: [e^{r_cE t}, theta0*e^{r_bD t}]
  cf = jnp.stack([jnp.exp(hp['r_cE'] * t_c),
                  hp['theta0'] * jnp.exp(hp['r_bD'] * t_c)], axis=1).astype(f32)

  # ---- RNN weights, hidden dim zero-padded to HP=16 ---------------------------
  wp = jnp.zeros((HP, 4), f32)
  wp = wp.at[:H, 0].set(w_ih[:, 0]).at[:H, 1].set(w_ih[:, 1])
  wp = wp.at[:H, 2].set(b_h).at[:H, 3].set(w_out[0, :])
  whh_p = jnp.zeros((HP, HP), f32).at[:H, :H].set(w_hh)

  kernel = functools.partial(
      _deep_hedging_kernel, lag=lag, n_coarse=nc,
      gas=float(hp['gas']), v_init=float(hp['v_init']))

  out_sds = jax.ShapeDtypeStruct((nc, B_pad), f32)
  v, pay, cost = pl.pallas_call(
      kernel,
      out_shape=(out_sds, out_sds, out_sds),
      grid_spec=pltpu.PrefetchScalarGridSpec(
          num_scalar_prefetch=0,
          grid=(B_pad // BT,),
          in_specs=[
              pl.BlockSpec((N, BT), lambda b: (0, b)),               # x
              pl.BlockSpec((1, BT), lambda b: (0, b)),               # x0
              pl.BlockSpec((N, 1), lambda b: (0, 0)),                # thr
              pl.BlockSpec((nc, 2), lambda b: (0, 0)),               # cf
              pl.BlockSpec(memory_space=pltpu.MemorySpace.SMEM),     # scal
              pl.BlockSpec((HP, 4), lambda b: (0, 0)),               # w_small
              pl.BlockSpec((HP, HP), lambda b: (0, 0)),              # whh
          ],
          out_specs=(pl.BlockSpec((nc, BT), lambda b: (0, b)),) * 3,
          scratch_shapes=[pltpu.VMEM((nc, BT), f32)]),               # nl scratch
      compiler_params=pltpu.CompilerParams(
          dimension_semantics=("parallel",),
          vmem_limit_bytes=vmem_limit),
  )(x_tb, x0_row, thr, cf, scal, wp, whh_p)

  to_bt1 = lambda a: jnp.transpose(a[:, :B])[:, :, None]
  return to_bt1(v), to_bt1(pay), to_bt1(cost)


# ----------------------------- plain-JAX glue ---------------------------------
def init_params(key, scale=0.3):
  k1, k2, k3, k4 = jax.random.split(key, 4)
  w_ih = scale * jax.random.normal(k1, (H, 2), jnp.float32)
  w_hh = scale * jax.random.normal(k2, (H, H), jnp.float32)
  b_h = scale * jax.random.normal(k3, (H,), jnp.float32)
  w_out = scale * jax.random.normal(k4, (1, H), jnp.float32)
  b_out = jnp.zeros((1,), jnp.float32)
  return w_ih, w_hh, b_h, w_out, b_out


def gbm_paths_time_major(key, ts, x0, mu, sigma):
  """Stand-in for market_generator.sdeint: GBM paths produced TIME-MAJOR
  (N, B) so the kernel input needs no extra HBM transpose pass."""
  dt = jnp.diff(ts)
  B = x0.shape[0]
  z = jax.random.normal(key, (dt.shape[0], B), jnp.float32)
  incr = (mu - 0.5 * sigma ** 2) * dt[:, None] + sigma * jnp.sqrt(dt)[:, None] * z
  log_x = jnp.concatenate(
      [jnp.zeros((1, B), jnp.float32), jnp.cumsum(incr, axis=0)], axis=0)
  return x0[None, :] * jnp.exp(log_x)          # (N, B)


def reference_forward(ts, lag, x0, x_tm, params, hp):
  """Pure-JAX reference mirroring the PyTorch forward()."""
  w_ih, w_hh, b_h, w_out, b_out = params
  B, N = x0.shape[0], ts.shape[0]
  nc = len(range(0, N, lag))
  x = jnp.transpose(x_tm)                       # (B, N)
  disc = ts[::lag]
  xn = x / x0[:, None]
  PH = lax.Precision.HIGHEST

  hi = jnp.zeros((B, H), jnp.float32)
  hedges = []
  for i in range(nc):
    inp = jnp.stack([jnp.full((B,), disc[i]), xn[:, i * lag]], axis=1)
    hi = jnp.tanh(jnp.dot(inp, w_ih.T, precision=PH)
                  + jnp.dot(hi, w_hh.T, precision=PH) + b_h)
    hedges.append(jnp.dot(hi, w_out.T, precision=PH) + b_out)
  hedge = jnp.stack(hedges, axis=1)[:, :, 0]                      # (B, nc)

  v = jnp.full((B, nc), hp['v_init'], jnp.float32)
  pay = jnp.full((B, nc), x0[0] * (1.0 - hp['theta0']), jnp.float32)
  cost = jnp.zeros((B, nc), jnp.float32)
  for i in range(nc - 1):
    p, p_new = x[:, lag * i], x[:, lag * (i + 1)]
    dt = disc[i + 1] - disc[i]
    hd = hedge[:, i]
    resid = v[:, i] - hd * p
    v_new = ((1 + hp['r_cD'] * dt) * jnp.maximum(resid, 0.)
             + (1 + hp['r_bD'] * dt) * jnp.minimum(resid, 0.)
             + (1 + hp['r_cE'] * dt) * jnp.maximum(hd, 0.) * p_new
             + (1 + hp['r_bE'] * dt) * jnp.minimum(hd, 0.) * p_new)
    payoff = (p_new * jnp.exp(hp['r_cE'] * disc[i + 1])
              - hp['theta0'] * x0 * jnp.exp(hp['r_bD'] * disc[i + 1]))
    tv = ts[:lag * (i + 1)]
    liq = jnp.any(hp['theta'] * x[:, :lag * (i + 1)] * jnp.exp(hp['r_cE'] * tv)[None, :]
                  <= hp['theta0'] * x0[:, None] * jnp.exp(hp['r_bD'] * tv)[None, :],
                  axis=1)
    notl = (~liq).astype(jnp.float32)
    payoff, v_new = payoff * notl, v_new * notl
    change = hd if i == 0 else hd - hedge[:, i - 1]
    tc = (cost[:, i] + hp['gas'] * (1 - jnp.exp(-10. * change ** 2))) * notl
    v = v.at[:, i + 1].set(v_new)
    pay = pay.at[:, i + 1].set(payoff)
    cost = cost.at[:, i + 1].set(tc)
  return v[:, :, None], pay[:, :, None], cost[:, :, None]


if __name__ == "__main__":
  key = jax.random.PRNGKey(0)
  B, N, lag = 8, 16, 2
  p0 = 1500.0
  ts = jnp.linspace(0.0, 1.0, N).astype(jnp.float32)
  x0 = jnp.ones((B,), jnp.float32) * p0

  kp, kx = jax.random.split(key)
  params = init_params(kp)
  x_tm = gbm_paths_time_major(kx, ts, x0, mu=0.0, sigma=0.4)   # (N, B)

  hp = dict(r_cD=0.01, r_bD=0.03, r_cE=0.005, r_bE=0.04,
            theta0=0.75, theta=0.85, gas=1.0, v_init=1000.0)

  v, pay, cost = deep_hedging_barrier_forward(ts, lag, x0, x_tm, params, hp)
  jax.block_until_ready((v, pay, cost))

  v_r, pay_r, cost_r = reference_forward(ts, lag, x0, x_tm, params, hp)
  np.testing.assert_allclose(np.asarray(v), np.asarray(v_r), rtol=2e-2, atol=2.0)
  np.testing.assert_allclose(np.asarray(pay), np.asarray(pay_r), rtol=2e-2, atol=2.0)
  np.testing.assert_allclose(np.asarray(cost), np.asarray(cost_r), rtol=2e-2, atol=5e-2)

  print("KERNEL_OK")
</pallas_src>

<mosaic_0001>
module attributes {stable_mosaic.version = 11 : i64} {
  func.func @_deep_hedging_kernel(%arg0: i32, %arg1: memref<16x128xf32, #tpu.memory_space<vmem>>, %arg2: memref<1x128xf32, #tpu.memory_space<vmem>>, %arg3: memref<16x1xf32, #tpu.memory_space<vmem>>, %arg4: memref<8x2xf32, #tpu.memory_space<vmem>>, %arg5: memref<8x8xf32, #tpu.memory_space<smem>>, %arg6: memref<16x4xf32, #tpu.memory_space<vmem>>, %arg7: memref<16x16xf32, #tpu.memory_space<vmem>>, %arg8: memref<8x128xf32, #tpu.memory_space<vmem>>, %arg9: memref<8x128xf32, #tpu.memory_space<vmem>>, %arg10: memref<8x128xf32, #tpu.memory_space<vmem>>, %arg11: memref<8x128xf32, #tpu.memory_space<vmem>>) attributes {dimension_semantics = [#tpu.dimension_semantics<parallel>], iteration_bounds = array<i64: 1>, scalar_prefetch = 0 : i64, scratch_operands = 1 : i64, tpu.core_type = #tpu.core_type<tc>, window_params = [{transform_indices = @transform_0, window_bounds = array<i64: 16, 128>}, {transform_indices = @transform_1, window_bounds = array<i64: 1, 128>}, {pipeline_mode = #tpu.pipeline_mode<synchronous>, transform_indices = @transform_2, window_bounds = array<i64: 16, 1>}, {pipeline_mode = #tpu.pipeline_mode<synchronous>, transform_indices = @transform_3, window_bounds = array<i64: 8, 2>}, {transform_indices = @transform_4, window_bounds = array<i64: 8, 8>}, {pipeline_mode = #tpu.pipeline_mode<synchronous>, transform_indices = @transform_5, window_bounds = array<i64: 16, 4>}, {pipeline_mode = #tpu.pipeline_mode<synchronous>, transform_indices = @transform_6, window_bounds = array<i64: 16, 16>}, {transform_indices = @transform_7, window_bounds = array<i64: 8, 128>}, {transform_indices = @transform_8, window_bounds = array<i64: 8, 128>}, {transform_indices = @transform_9, window_bounds = array<i64: 8, 128>}]} {
    %c0 = arith.constant 0 : index
    %c0_0 = arith.constant 0 : index
    %0 = vector.load %arg2[%c0, %c0_0] : memref<1x128xf32, #tpu.memory_space<vmem>>, vector<1x128xf32>
    %cst = arith.constant 1.000000e+00 : f32
    %1 = vector.broadcast %cst : f32 to vector<1x128xf32>
    %2 = arith.divf %1, %0 : vector<1x128xf32>
    %c0_1 = arith.constant 0 : index
    %c0_2 = arith.constant 0 : index
    %3 = vector.load %arg6[%c0_1, %c0_2] : memref<16x4xf32, #tpu.memory_space<vmem>>, vector<16x1xf32>
    %c0_3 = arith.constant 0 : index
    %c1 = arith.constant 1 : index
    %4 = vector.load %arg6[%c0_3, %c1] : memref<16x4xf32, #tpu.memory_space<vmem>>, vector<16x1xf32>
    %c0_4 = arith.constant 0 : index
    %c2 = arith.constant 2 : index
    %5 = vector.load %arg6[%c0_4, %c2] : memref<16x4xf32, #tpu.memory_space<vmem>>, vector<16x1xf32>
    %c0_5 = arith.constant 0 : index
    %c3 = arith.constant 3 : index
    %6 = vector.load %arg6[%c0_5, %c3] : memref<16x4xf32, #tpu.memory_space<vmem>>, vector<16x1xf32>
    %c0_6 = arith.constant 0 : index
    %c0_7 = arith.constant 0 : index
    %7 = vector.load %arg7[%c0_6, %c0_7] : memref<16x16xf32, #tpu.memory_space<vmem>>, vector<16x16xf32>
    %c0_8 = arith.constant 0 : index
    %c5 = arith.constant 5 : index
    %8 = memref.load %arg5[%c0_8, %c5] : memref<8x8xf32, #tpu.memory_space<smem>>
    %c0_9 = arith.constant 0 : index
    %c6 = arith.constant 6 : index
    %9 = memref.load %arg5[%c0_9, %c6] : memref<8x8xf32, #tpu.memory_space<smem>>
    %10 = vector.broadcast %9 : f32 to vector<1x128xf32>
    %cst_10 = arith.constant 0.000000e+00 : f32
    %11 = vector.broadcast %cst_10 : f32 to vector<1x128xf32>
    %c0_11 = arith.constant 0 : index
    %c0_12 = arith.constant 0 : index
    %12 = vector.load %arg1[%c0_11, %c0_12] : memref<16x128xf32, #tpu.memory_space<vmem>>, vector<2x128xf32>
    %c0_13 = arith.constant 0 : index
    %c0_14 = arith.constant 0 : index
    %13 = vector.load %arg3[%c0_13, %c0_14] : memref<16x1xf32, #tpu.memory_space<vmem>>, vector<2x1xf32>
    %14 = vector.broadcast %13 : vector<2x1xf32> to vector<2x128xf32>
    %15 = vector.broadcast %0 : vector<1x128xf32> to vector<2x128xf32>
    %16 = arith.mulf %14, %15 : vector<2x128xf32>
    %17 = arith.cmpf ole, %12, %16 : vector<2x128xf32>
    %18 = arith.extui %17 : vector<2x128xi1> to vector<2x128xi32>
    %19 = arith.sitofp %18 : vector<2x128xi32> to vector<2x128xf32>
    %cst_15 = arith.constant dense<0xFF800000> : vector<128xf32>
    %20 = vector.multi_reduction <maximumf>, %19, %cst_15 [0] : vector<2x128xf32> to vector<128xf32>
    %21 = vector.shape_cast %20 : vector<128xf32> to vector<1x128xf32>
    %22 = arith.maximumf %11, %21 : vector<1x128xf32>
    %cst_16 = arith.constant 1.000000e+00 : f32
    %23 = vector.broadcast %cst_16 : f32 to vector<1x128xf32>
    %24 = arith.subf %23, %22 : vector<1x128xf32>
    %c1_17 = arith.constant 1 : index
    %c0_18 = arith.constant 0 : index
    %25 = vector.load %arg4[%c1_17, %c0_18] : memref<8x2xf32, #tpu.memory_space<vmem>>, vector<1x2xf32>
    %c2_19 = arith.constant 2 : index
    %c0_20 = arith.constant 0 : index
    %26 = vector.load %arg1[%c2_19, %c0_20] : memref<16x128xf32, #tpu.memory_space<vmem>>, vector<1x128xf32>
    %27 = vector.extract_strided_slice %25 {offsets = [0, 0], sizes = [1, 1], strides = [1, 1]} : vector<1x2xf32> to vector<1x1xf32>
    %28 = vector.broadcast %27 : vector<1x1xf32> to vector<1x128xf32>
    %29 = arith.mulf %26, %28 : vector<1x128xf32>
    %30 = vector.extract_strided_slice %25 {offsets = [0, 1], sizes = [1, 1], strides = [1, 1]} : vector<1x2xf32> to vector<1x1xf32>
    %31 = vector.broadcast %30 : vector<1x1xf32> to vector<1x128xf32>
    %32 = arith.mulf %0, %31 : vector<1x128xf32>
    %33 = arith.subf %29, %32 : vector<1x128xf32>
    %34 = arith.mulf %33, %24 : vector<1x128xf32>
    %c2_21 = arith.constant 2 : index
    %c0_22 = arith.constant 0 : index
    %35 = vector.load %arg1[%c2_21, %c0_22] : memref<16x128xf32, #tpu.memory_space<vmem>>, vector<2x128xf32>
    %c2_23 = arith.constant 2 : index
    %c0_24 = arith.constant 0 : index
    %36 = vector.load %arg3[%c2_23, %c0_24] : memref<16x1xf32, #tpu.memory_space<vmem>>, vector<2x1xf32>
    %37 = vector.broadcast %36 : vector<2x1xf32> to vector<2x128xf32>
    %38 = vector.broadcast %0 : vector<1x128xf32> to vector<2x128xf32>
    %39 = arith.mulf %37, %38 : vector<2x128xf32>
    %40 = arith.cmpf ole, %35, %39 : vector<2x128xf32>
    %41 = arith.extui %40 : vector<2x128xi1> to vector<2x128xi32>
    %42 = arith.sitofp %41 : vector<2x128xi32> to vector<2x128xf32>
    %cst_25 = arith.constant dense<0xFF800000> : vector<128xf32>
    %43 = vector.multi_reduction <maximumf>, %42, %cst_25 [0] : vector<2x128xf32> to vector<128xf32>
    %44 = vector.shape_cast %43 : vector<128xf32> to vector<1x128xf32>
    %45 = arith.maximumf %22, %44 : vector<1x128xf32>
    %cst_26 = arith.constant 1.000000e+00 : f32
    %46 = vector.broadcast %cst_26 : f32 to vector<1x128xf32>
    %47 = arith.subf %46, %45 : vector<1x128xf32>
    %c2_27 = arith.constant 2 : index
    %c0_28 = arith.constant 0 : index
    %48 = vector.load %arg4[%c2_27, %c0_28] : memref<8x2xf32, #tpu.memory_space<vmem>>, vector<1x2xf32>
    %c4 = arith.constant 4 : index
    %c0_29 = arith.constant 0 : index
    %49 = vector.load %arg1[%c4, %c0_29] : memref<16x128xf32, #tpu.memory_space<vmem>>, vector<1x128xf32>
    %50 = vector.extract_strided_slice %48 {offsets = [0, 0], sizes = [1, 1], strides = [1, 1]} : vector<1x2xf32> to vector<1x1xf32>
    %51 = vector.broadcast %50 : vector<1x1xf32> to vector<1x128xf32>
    %52 = arith.mulf %49, %51 : vector<1x128xf32>
    %53 = vector.extract_strided_slice %48 {offsets = [0, 1], sizes = [1, 1], strides = [1, 1]} : vector<1x2xf32> to vector<1x1xf32>
    %54 = vector.broadcast %53 : vector<1x1xf32> to vector<1x128xf32>
    %55 = arith.mulf %0, %54 : vector<1x128xf32>
    %56 = arith.subf %52, %55 : vector<1x128xf32>
    %57 = arith.mulf %56, %47 : vector<1x128xf32>
    %c4_30 = arith.constant 4 : index
    %c0_31 = arith.constant 0 : index
    %58 = vector.load %arg1[%c4_30, %c0_31] : memref<16x128xf32, #tpu.memory_space<vmem>>, vector<2x128xf32>
    %c4_32 = arith.constant 4 : index
    %c0_33 = arith.constant 0 : index
    %59 = vector.load %arg3[%c4_32, %c0_33] : memref<16x1xf32, #tpu.memory_space<vmem>>, vector<2x1xf32>
    %60 = vector.broadcast %59 : vector<2x1xf32> to vector<2x128xf32>
    %61 = vector.broadcast %0 : vector<1x128xf32> to vector<2x128xf32>
    %62 = arith.mulf %60, %61 : vector<2x128xf32>
    %63 = arith.cmpf ole, %58, %62 : vector<2x128xf32>
    %64 = arith.extui %63 : vector<2x128xi1> to vector<2x128xi32>
    %65 = arith.sitofp %64 : vector<2x128xi32> to vector<2x128xf32>
    %cst_34 = arith.constant dense<0xFF800000> : vector<128xf32>
    %66 = vector.multi_reduction <maximumf>, %65, %cst_34 [0] : vector<2x128xf32> to vector<128xf32>
    %67 = vector.shape_cast %66 : vector<128xf32> to vector<1x128xf32>
    %68 = arith.maximumf %45, %67 : vector<1x128xf32>
    %cst_35 = arith.constant 1.000000e+00 : f32
    %69 = vector.broadcast %cst_35 : f32 to vector<1x128xf32>
    %70 = arith.subf %69, %68 : vector<1x128xf32>
    %c3_36 = arith.constant 3 : index
    %c0_37 = arith.constant 0 : index
    %71 = vector.load %arg4[%c3_36, %c0_37] : memref<8x2xf32, #tpu.memory_space<vmem>>, vector<1x2xf32>
    %c6_38 = arith.constant 6 : index
    %c0_39 = arith.constant 0 : index
    %72 = vector.load %arg1[%c6_38, %c0_39] : memref<16x128xf32, #tpu.memory_space<vmem>>, vector<1x128xf32>
    %73 = vector.extract_strided_slice %71 {offsets = [0, 0], sizes = [1, 1], strides = [1, 1]} : vector<1x2xf32> to vector<1x1xf32>
    %74 = vector.broadcast %73 : vector<1x1xf32> to vector<1x128xf32>
    %75 = arith.mulf %72, %74 : vector<1x128xf32>
    %76 = vector.extract_strided_slice %71 {offsets = [0, 1], sizes = [1, 1], strides = [1, 1]} : vector<1x2xf32> to vector<1x1xf32>
    %77 = vector.broadcast %76 : vector<1x1xf32> to vector<1x128xf32>
    %78 = arith.mulf %0, %77 : vector<1x128xf32>
    %79 = arith.subf %75, %78 : vector<1x128xf32>
    %80 = arith.mulf %79, %70 : vector<1x128xf32>
    %c6_40 = arith.constant 6 : index
    %c0_41 = arith.constant 0 : index
    %81 = vector.load %arg1[%c6_40, %c0_41] : memref<16x128xf32, #tpu.memory_space<vmem>>, vector<2x128xf32>
    %c6_42 = arith.constant 6 : index
    %c0_43 = arith.constant 0 : index
    %82 = vector.load %arg3[%c6_42, %c0_43] : memref<16x1xf32, #tpu.memory_space<vmem>>, vector<2x1xf32>
    %83 = vector.broadcast %82 : vector<2x1xf32> to vector<2x128xf32>
    %84 = vector.broadcast %0 : vector<1x128xf32> to vector<2x128xf32>
    %85 = arith.mulf %83, %84 : vector<2x128xf32>
    %86 = arith.cmpf ole, %81, %85 : vector<2x128xf32>
    %87 = arith.extui %86 : vector<2x128xi1> to vector<2x128xi32>
    %88 = arith.sitofp %87 : vector<2x128xi32> to vector<2x128xf32>
    %cst_44 = arith.constant dense<0xFF800000> : vector<128xf32>
    %89 = vector.multi_reduction <maximumf>, %88, %cst_44 [0] : vector<2x128xf32> to vector<128xf32>
    %90 = vector.shape_cast %89 : vector<128xf32> to vector<1x128xf32>
    %91 = arith.maximumf %68, %90 : vector<1x128xf32>
    %cst_45 = arith.constant 1.000000e+00 : f32
    %92 = vector.broadcast %cst_45 : f32 to vector<1x128xf32>
    %93 = arith.subf %92, %91 : vector<1x128xf32>
    %c4_46 = arith.constant 4 : index
    %c0_47 = arith.constant 0 : index
    %94 = vector.load %arg4[%c4_46, %c0_47] : memref<8x2xf32, #tpu.memory_space<vmem>>, vector<1x2xf32>
    %c8 = arith.constant 8 : index
    %c0_48 = arith.constant 0 : index
    %95 = vector.load %arg1[%c8, %c0_48] : memref<16x128xf32, #tpu.memory_space<vmem>>, vector<1x128xf32>
    %96 = vector.extract_strided_slice %94 {offsets = [0, 0], sizes = [1, 1], strides = [1, 1]} : vector<1x2xf32> to vector<1x1xf32>
    %97 = vector.broadcast %96 : vector<1x1xf32> to vector<1x128xf32>
    %98 = arith.mulf %95, %97 : vector<1x128xf32>
    %99 = vector.extract_strided_slice %94 {offsets = [0, 1], sizes = [1, 1], strides = [1, 1]} : vector<1x2xf32> to vector<1x1xf32>
    %100 = vector.broadcast %99 : vector<1x1xf32> to vector<1x128xf32>
    %101 = arith.mulf %0, %100 : vector<1x128xf32>
    %102 = arith.subf %98, %101 : vector<1x128xf32>
    %103 = arith.mulf %102, %93 : vector<1x128xf32>
    %c8_49 = arith.constant 8 : index
    %c0_50 = arith.constant 0 : index
    %104 = vector.load %arg1[%c8_49, %c0_50] : memref<16x128xf32, #tpu.memory_space<vmem>>, vector<2x128xf32>
    %c8_51 = arith.constant 8 : index
    %c0_52 = arith.constant 0 : index
    %105 = vector.load %arg3[%c8_51, %c0_52] : memref<16x1xf32, #tpu.memory_space<vmem>>, vector<2x1xf32>
    %106 = vector.broadcast %105 : vector<2x1xf32> to vector<2x128xf32>
    %107 = vector.broadcast %0 : vector<1x128xf32> to vector<2x128xf32>
    %108 = arith.mulf %106, %107 : vector<2x128xf32>
    %109 = arith.cmpf ole, %104, %108 : vector<2x128xf32>
    %110 = arith.extui %109 : vector<2x128xi1> to vector<2x128xi32>
    %111 = arith.sitofp %110 : vector<2x128xi32> to vector<2x128xf32>
    %cst_53 = arith.constant dense<0xFF800000> : vector<128xf32>
    %112 = vector.multi_reduction <maximumf>, %111, %cst_53 [0] : vector<2x128xf32> to vector<128xf32>
    %113 = vector.shape_cast %112 : vector<128xf32> to vector<1x128xf32>
    %114 = arith.maximumf %91, %113 : vector<1x128xf32>
    %cst_54 = arith.constant 1.000000e+00 : f32
    %115 = vector.broadcast %cst_54 : f32 to vector<1x128xf32>
    %116 = arith.subf %115, %114 : vector<1x128xf32>
    %c5_55 = arith.constant 5 : index
    %c0_56 = arith.constant 0 : index
    %117 = vector.load %arg4[%c5_55, %c0_56] : memref<8x2xf32, #tpu.memory_space<vmem>>, vector<1x2xf32>
    %c10 = arith.constant 10 : index
    %c0_57 = arith.constant 0 : index
    %118 = vector.load %arg1[%c10, %c0_57] : memref<16x128xf32, #tpu.memory_space<vmem>>, vector<1x128xf32>
    %119 = vector.extract_strided_slice %117 {offsets = [0, 0], sizes = [1, 1], strides = [1, 1]} : vector<1x2xf32> to vector<1x1xf32>
    %120 = vector.broadcast %119 : vector<1x1xf32> to vector<1x128xf32>
    %121 = arith.mulf %118, %120 : vector<1x128xf32>
    %122 = vector.extract_strided_slice %117 {offsets = [0, 1], sizes = [1, 1], strides = [1, 1]} : vector<1x2xf32> to vector<1x1xf32>
    %123 = vector.broadcast %122 : vector<1x1xf32> to vector<1x128xf32>
    %124 = arith.mulf %0, %123 : vector<1x128xf32>
    %125 = arith.subf %121, %124 : vector<1x128xf32>
    %126 = arith.mulf %125, %116 : vector<1x128xf32>
    %c10_58 = arith.constant 10 : index
    %c0_59 = arith.constant 0 : index
    %127 = vector.load %arg1[%c10_58, %c0_59] : memref<16x128xf32, #tpu.memory_space<vmem>>, vector<2x128xf32>
    %c10_60 = arith.constant 10 : index
    %c0_61 = arith.constant 0 : index
    %128 = vector.load %arg3[%c10_60, %c0_61] : memref<16x1xf32, #tpu.memory_space<vmem>>, vector<2x1xf32>
    %129 = vector.broadcast %128 : vector<2x1xf32> to vector<2x128xf32>
    %130 = vector.broadcast %0 : vector<1x128xf32> to vector<2x128xf32>
    %131 = arith.mulf %129, %130 : vector<2x128xf32>
    %132 = arith.cmpf ole, %127, %131 : vector<2x128xf32>
    %133 = arith.extui %132 : vector<2x128xi1> to vector<2x128xi32>
    %134 = arith.sitofp %133 : vector<2x128xi32> to vector<2x128xf32>
    %cst_62 = arith.constant dense<0xFF800000> : vector<128xf32>
    %135 = vector.multi_reduction <maximumf>, %134, %cst_62 [0] : vector<2x128xf32> to vector<128xf32>
    %136 = vector.shape_cast %135 : vector<128xf32> to vector<1x128xf32>
    %137 = arith.maximumf %114, %136 : vector<1x128xf32>
    %cst_63 = arith.constant 1.000000e+00 : f32
    %138 = vector.broadcast %cst_63 : f32 to vector<1x128xf32>
    %139 = arith.subf %138, %137 : vector<1x128xf32>
    %c6_64 = arith.constant 6 : index
    %c0_65 = arith.constant 0 : index
    %140 = vector.load %arg4[%c6_64, %c0_65] : memref<8x2xf32, #tpu.memory_space<vmem>>, vector<1x2xf32>
    %c12 = arith.constant 12 : index
    %c0_66 = arith.constant 0 : index
    %141 = vector.load %arg1[%c12, %c0_66] : memref<16x128xf32, #tpu.memory_space<vmem>>, vector<1x128xf32>
    %142 = vector.extract_strided_slice %140 {offsets = [0, 0], sizes = [1, 1], strides = [1, 1]} : vector<1x2xf32> to vector<1x1xf32>
    %143 = vector.broadcast %142 : vector<1x1xf32> to vector<1x128xf32>
    %144 = arith.mulf %141, %143 : vector<1x128xf32>
    %145 = vector.extract_strided_slice %140 {offsets = [0, 1], sizes = [1, 1], strides = [1, 1]} : vector<1x2xf32> to vector<1x1xf32>
    %146 = vector.broadcast %145 : vector<1x1xf32> to vector<1x128xf32>
    %147 = arith.mulf %0, %146 : vector<1x128xf32>
    %148 = arith.subf %144, %147 : vector<1x128xf32>
    %149 = arith.mulf %148, %139 : vector<1x128xf32>
    %c12_67 = arith.constant 12 : index
    %c0_68 = arith.constant 0 : index
    %150 = vector.load %arg1[%c12_67, %c0_68] : memref<16x128xf32, #tpu.memory_space<vmem>>, vector<2x128xf32>
    %c12_69 = arith.constant 12 : index
    %c0_70 = arith.constant 0 : index
    %151 = vector.load %arg3[%c12_69, %c0_70] : memref<16x1xf32, #tpu.memory_space<vmem>>, vector<2x1xf32>
    %152 = vector.broadcast %151 : vector<2x1xf32> to vector<2x128xf32>
    %153 = vector.broadcast %0 : vector<1x128xf32> to vector<2x128xf32>
    %154 = arith.mulf %152, %153 : vector<2x128xf32>
    %155 = arith.cmpf ole, %150, %154 : vector<2x128xf32>
    %156 = arith.extui %155 : vector<2x128xi1> to vector<2x128xi32>
    %157 = arith.sitofp %156 : vector<2x128xi32> to vector<2x128xf32>
    %cst_71 = arith.constant dense<0xFF800000> : vector<128xf32>
    %158 = vector.multi_reduction <maximumf>, %157, %cst_71 [0] : vector<2x128xf32> to vector<128xf32>
    %159 = vector.shape_cast %158 : vector<128xf32> to vector<1x128xf32>
    %160 = arith.maximumf %137, %159 : vector<1x128xf32>
    %cst_72 = arith.constant 1.000000e+00 : f32
    %161 = vector.broadcast %cst_72 : f32 to vector<1x128xf32>
    %162 = arith.subf %161, %160 : vector<1x128xf32>
    %c7 = arith.constant 7 : index
    %c0_73 = arith.constant 0 : index
    %163 = vector.load %arg4[%c7, %c0_73] : memref<8x2xf32, #tpu.memory_space<vmem>>, vector<1x2xf32>
    %c14 = arith.constant 14 : index
    %c0_74 = arith.constant 0 : index
    %164 = vector.load %arg1[%c14, %c0_74] : memref<16x128xf32, #tpu.memory_space<vmem>>, vector<1x128xf32>
    %165 = vector.extract_strided_slice %163 {offsets = [0, 0], sizes = [1, 1], strides = [1, 1]} : vector<1x2xf32> to vector<1x1xf32>
    %166 = vector.broadcast %165 : vector<1x1xf32> to vector<1x128xf32>
    %167 = arith.mulf %164, %166 : vector<1x128xf32>
    %168 = vector.extract_strided_slice %163 {offsets = [0, 1], sizes = [1, 1], strides = [1, 1]} : vector<1x2xf32> to vector<1x1xf32>
    %169 = vector.broadcast %168 : vector<1x1xf32> to vector<1x128xf32>
    %170 = arith.mulf %0, %169 : vector<1x128xf32>
    %171 = arith.subf %167, %170 : vector<1x128xf32>
    %172 = arith.mulf %171, %162 : vector<1x128xf32>
    %173 = tpu.concatenate %10, %34, %57, %80, %103, %126, %149, %172 in 0 : vector<1x128xf32>, vector<1x128xf32>, vector<1x128xf32>, vector<1x128xf32>, vector<1x128xf32>, vector<1x128xf32>, vector<1x128xf32>, vector<1x128xf32> -> vector<8x128xf32>
    %c0_75 = arith.constant 0 : index
    %c0_76 = arith.constant 0 : index
    %174 = vector.load %arg9[%c0_75, %c0_76] : memref<8x128xf32, #tpu.memory_space<vmem>>, vector<8x128xf32>
    tpu.vector_store %arg9[%c0_75, %c0_76], %173 {strides = array<i32>} : memref<8x128xf32, #tpu.memory_space<vmem>>, vector<8x128xf32>,
    %cst_77 = arith.constant 0.000000e+00 : f32
    %175 = vector.broadcast %cst_77 : f32 to vector<16x128xf32>
    %cst_78 = arith.constant 0.000000e+00 : f32
    %176 = vector.broadcast %cst_78 : f32 to vector<1x128xf32>
    %cst_79 = arith.constant 1.000000e+03 : f32
    %177 = vector.broadcast %cst_79 : f32 to vector<1x128xf32>
    %cst_80 = arith.constant 0.000000e+00 : f32
    %178 = vector.broadcast %cst_80 : f32 to vector<1x128xf32>
    %c0_81 = arith.constant 0 : index
    %c0_82 = arith.constant 0 : index
    %179 = vector.load %arg1[%c0_81, %c0_82] : memref<16x128xf32, #tpu.memory_space<vmem>>, vector<1x128xf32>
    %c2_83 = arith.constant 2 : index
    %c0_84 = arith.constant 0 : index
    %180 = vector.load %arg1[%c2_83, %c0_84] : memref<16x128xf32, #tpu.memory_space<vmem>>, vector<1x128xf32>
    %c0_85 = arith.constant 0 : index
    %c0_86 = arith.constant 0 : index
    %181 = memref.load %arg5[%c0_85, %c0_86] : memref<8x8xf32, #tpu.memory_space<smem>>
    %c0_87 = arith.constant 0 : index
    %c1_88 = arith.constant 1 : index
    %182 = memref.load %arg5[%c0_87, %c1_88] : memref<8x8xf32, #tpu.memory_space<smem>>
    %c0_89 = arith.constant 0 : index
    %c2_90 = arith.constant 2 : index
    %183 = memref.load %arg5[%c0_89, %c2_90] : memref<8x8xf32, #tpu.memory_space<smem>>
    %c0_91 = arith.constant 0 : index
    %c3_92 = arith.constant 3 : index
    %184 = memref.load %arg5[%c0_91, %c3_92] : memref<8x8xf32, #tpu.memory_space<smem>>
    %c0_93 = arith.constant 0 : index
    %c4_94 = arith.constant 4 : index
    %185 = memref.load %arg5[%c0_93, %c4_94] : memref<8x8xf32, #tpu.memory_space<smem>>
    %186 = arith.mulf %179, %2 : vector<1x128xf32>
    %cst_95 = arith.constant dense<0.000000e+00> : vector<16x128xf32>
    %187 = tpu.matmul %7, %175, %cst_95 {dimension_numbers = #tpu.dot_dimension_numbers<[1], [0], [0], [1], [0, 0, 1, 1], [], []>} : vector<16x16xf32>, vector<16x128xf32>, vector<16x128xf32> -> vector<16x128xf32>
    %188 = vector.broadcast %4 : vector<16x1xf32> to vector<16x128xf32>
    %189 = vector.broadcast %186 : vector<1x128xf32> to vector<16x128xf32>
    %190 = arith.mulf %188, %189 : vector<16x128xf32>
    %191 = arith.addf %190, %187 : vector<16x128xf32>
    %192 = vector.broadcast %181 : f32 to vector<16x1xf32>
    %193 = arith.mulf %3, %192 : vector<16x1xf32>
    %194 = arith.addf %193, %5 : vector<16x1xf32>
    %195 = vector.broadcast %194 : vector<16x1xf32> to vector<16x128xf32>
    %196 = arith.addf %191, %195 : vector<16x128xf32>
    %197 = math.tanh %196 : vector<16x128xf32>
    %198 = vector.broadcast %6 : vector<16x1xf32> to vector<16x128xf32>
    %199 = arith.mulf %198, %197 : vector<16x128xf32>
    %cst_96 = arith.constant dense<0.000000e+00> : vector<128xf32>
    %200 = vector.multi_reduction <add>, %199, %cst_96 [0] : vector<16x128xf32> to vector<128xf32>
    %201 = vector.shape_cast %200 : vector<128xf32> to vector<1x128xf32>
    %202 = vector.broadcast %8 : f32 to vector<1x128xf32>
    %203 = arith.addf %201, %202 : vector<1x128xf32>
    %204 = arith.mulf %203, %179 : vector<1x128xf32>
    %205 = arith.subf %177, %204 : vector<1x128xf32>
    %cst_97 = arith.constant 0.000000e+00 : f32
    %206 = vector.broadcast %cst_97 : f32 to vector<1x128xf32>
    %207 = arith.maximumf %205, %206 : vector<1x128xf32>
    %208 = vector.broadcast %182 : f32 to vector<1x128xf32>
    %209 = arith.mulf %208, %207 : vector<1x128xf32>
    %cst_98 = arith.constant 0.000000e+00 : f32
    %210 = vector.broadcast %cst_98 : f32 to vector<1x128xf32>
    %211 = arith.minimumf %205, %210 : vector<1x128xf32>
    %212 = vector.broadcast %183 : f32 to vector<1x128xf32>
    %213 = arith.mulf %212, %211 : vector<1x128xf32>
    %214 = arith.addf %209, %213 : vector<1x128xf32>
    %cst_99 = arith.constant 0.000000e+00 : f32
    %215 = vector.broadcast %cst_99 : f32 to vector<1x128xf32>
    %216 = arith.maximumf %203, %215 : vector<1x128xf32>
    %217 = vector.broadcast %184 : f32 to vector<1x128xf32>
    %218 = arith.mulf %217, %216 : vector<1x128xf32>
    %cst_100 = arith.constant 0.000000e+00 : f32
    %219 = vector.broadcast %cst_100 : f32 to vector<1x128xf32>
    %220 = arith.minimumf %203, %219 : vector<1x128xf32>
    %221 = vector.broadcast %185 : f32 to vector<1x128xf32>
    %222 = arith.mulf %221, %220 : vector<1x128xf32>
    %223 = arith.addf %218, %222 : vector<1x128xf32>
    %224 = arith.mulf %223, %180 : vector<1x128xf32>
    %225 = arith.addf %214, %224 : vector<1x128xf32>
    %226 = arith.mulf %225, %24 : vector<1x128xf32>
    %227 = arith.subf %203, %176 : vector<1x128xf32>
    %cst_101 = arith.constant -1.000000e+01 : f32
    %228 = vector.broadcast %cst_101 : f32 to vector<1x128xf32>
    %229 = arith.mulf %228, %227 : vector<1x128xf32>
    %230 = arith.mulf %229, %227 : vector<1x128xf32>
    %231 = math.exp %230 : vector<1x128xf32>
    %cst_102 = arith.constant 1.000000e+00 : f32
    %232 = vector.broadcast %cst_102 : f32 to vector<1x128xf32>
    %233 = arith.subf %232, %231 : vector<1x128xf32>
    %cst_103 = arith.constant 1.000000e+00 : f32
    %234 = vector.broadcast %cst_103 : f32 to vector<1x128xf32>
    %235 = arith.mulf %234, %233 : vector<1x128xf32>
    %236 = arith.addf %178, %235 : vector<1x128xf32>
    %237 = arith.mulf %236, %24 : vector<1x128xf32>
    %c2_104 = arith.constant 2 : index
    %c0_105 = arith.constant 0 : index
    %238 = vector.load %arg1[%c2_104, %c0_105] : memref<16x128xf32, #tpu.memory_space<vmem>>, vector<1x128xf32>
    %c4_106 = arith.constant 4 : index
    %c0_107 = arith.constant 0 : index
    %239 = vector.load %arg1[%c4_106, %c0_107] : memref<16x128xf32, #tpu.memory_space<vmem>>, vector<1x128xf32>
    %c1_108 = arith.constant 1 : index
    %c0_109 = arith.constant 0 : index
    %240 = memref.load %arg5[%c1_108, %c0_109] : memref<8x8xf32, #tpu.memory_space<smem>>
    %c1_110 = arith.constant 1 : index
    %c1_111 = arith.constant 1 : index
    %241 = memref.load %arg5[%c1_110, %c1_111] : memref<8x8xf32, #tpu.memory_space<smem>>
    %c1_112 = arith.constant 1 : index
    %c2_113 = arith.constant 2 : index
    %242 = memref.load %arg5[%c1_112, %c2_113] : memref<8x8xf32, #tpu.memory_space<smem>>
    %c1_114 = arith.constant 1 : index
    %c3_115 = arith.constant 3 : index
    %243 = memref.load %arg5[%c1_114, %c3_115] : memref<8x8xf32, #tpu.memory_space<smem>>
    %c1_116 = arith.constant 1 : index
    %c4_117 = arith.constant 4 : index
    %244 = memref.load %arg5[%c1_116, %c4_117] : memref<8x8xf32, #tpu.memory_space<smem>>
    %245 = arith.mulf %238, %2 : vector<1x128xf32>
    %cst_118 = arith.constant dense<0.000000e+00> : vector<16x128xf32>
    %246 = tpu.matmul %7, %197, %cst_118 {dimension_numbers = #tpu.dot_dimension_numbers<[1], [0], [0], [1], [0, 0, 1, 1], [], []>} : vector<16x16xf32>, vector<16x128xf32>, vector<16x128xf32> -> vector<16x128xf32>
    %247 = vector.broadcast %4 : vector<16x1xf32> to vector<16x128xf32>
    %248 = vector.broadcast %245 : vector<1x128xf32> to vector<16x128xf32>
    %249 = arith.mulf %247, %248 : vector<16x128xf32>
    %250 = arith.addf %249, %246 : vector<16x128xf32>
    %251 = vector.broadcast %240 : f32 to vector<16x1xf32>
    %252 = arith.mulf %3, %251 : vector<16x1xf32>
    %253 = arith.addf %252, %5 : vector<16x1xf32>
    %254 = vector.broadcast %253 : vector<16x1xf32> to vector<16x128xf32>
    %255 = arith.addf %250, %254 : vector<16x128xf32>
    %256 = math.tanh %255 : vector<16x128xf32>
    %257 = vector.broadcast %6 : vector<16x1xf32> to vector<16x128xf32>
    %258 = arith.mulf %257, %256 : vector<16x128xf32>
    %cst_119 = arith.constant dense<0.000000e+00> : vector<128xf32>
    %259 = vector.multi_reduction <add>, %258, %cst_119 [0] : vector<16x128xf32> to vector<128xf32>
    %260 = vector.shape_cast %259 : vector<128xf32> to vector<1x128xf32>
    %261 = vector.broadcast %8 : f32 to vector<1x128xf32>
    %262 = arith.addf %260, %261 : vector<1x128xf32>
    %263 = arith.mulf %262, %238 : vector<1x128xf32>
    %264 = arith.subf %226, %263 : vector<1x128xf32>
    %cst_120 = arith.constant 0.000000e+00 : f32
    %265 = vector.broadcast %cst_120 : f32 to vector<1x128xf32>
    %266 = arith.maximumf %264, %265 : vector<1x128xf32>
    %267 = vector.broadcast %241 : f32 to vector<1x128xf32>
    %268 = arith.mulf %267, %266 : vector<1x128xf32>
    %cst_121 = arith.constant 0.000000e+00 : f32
    %269 = vector.broadcast %cst_121 : f32 to vector<1x128xf32>
    %270 = arith.minimumf %264, %269 : vector<1x128xf32>
    %271 = vector.broadcast %242 : f32 to vector<1x128xf32>
    %272 = arith.mulf %271, %270 : vector<1x128xf32>
    %273 = arith.addf %268, %272 : vector<1x128xf32>
    %cst_122 = arith.constant 0.000000e+00 : f32
    %274 = vector.broadcast %cst_122 : f32 to vector<1x128xf32>
    %275 = arith.maximumf %262, %274 : vector<1x128xf32>
    %276 = vector.broadcast %243 : f32 to vector<1x128xf32>
    %277 = arith.mulf %276, %275 : vector<1x128xf32>
    %cst_123 = arith.constant 0.000000e+00 : f32
    %278 = vector.broadcast %cst_123 : f32 to vector<1x128xf32>
    %279 = arith.minimumf %262, %278 : vector<1x128xf32>
    %280 = vector.broadcast %244 : f32 to vector<1x128xf32>
    %281 = arith.mulf %280, %279 : vector<1x128xf32>
    %282 = arith.addf %277, %281 : vector<1x128xf32>
    %283 = arith.mulf %282, %239 : vector<1x128xf32>
    %284 = arith.addf %273, %283 : vector<1x128xf32>
    %285 = arith.mulf %284, %47 : vector<1x128xf32>
    %286 = arith.subf %262, %203 : vector<1x128xf32>
    %cst_124 = arith.constant -1.000000e+01 : f32
    %287 = vector.broadcast %cst_124 : f32 to vector<1x128xf32>
    %288 = arith.mulf %287, %286 : vector<1x128xf32>
    %289 = arith.mulf %288, %286 : vector<1x128xf32>
    %290 = math.exp %289 : vector<1x128xf32>
    %cst_125 = arith.constant 1.000000e+00 : f32
    %291 = vector.broadcast %cst_125 : f32 to vector<1x128xf32>
    %292 = arith.subf %291, %290 : vector<1x128xf32>
    %cst_126 = arith.constant 1.000000e+00 : f32
    %293 = vector.broadcast %cst_126 : f32 to vector<1x128xf32>
    %294 = arith.mulf %293, %292 : vector<1x128xf32>
    %295 = arith.addf %237, %294 : vector<1x128xf32>
    %296 = arith.mulf %295, %47 : vector<1x128xf32>
    %c4_127 = arith.constant 4 : index
    %c0_128 = arith.constant 0 : index
    %297 = vector.load %arg1[%c4_127, %c0_128] : memref<16x128xf32, #tpu.memory_space<vmem>>, vector<1x128xf32>
    %c6_129 = arith.constant 6 : index
    %c0_130 = arith.constant 0 : index
    %298 = vector.load %arg1[%c6_129, %c0_130] : memref<16x128xf32, #tpu.memory_space<vmem>>, vector<1x128xf32>
    %c2_131 = arith.constant 2 : index
    %c0_132 = arith.constant 0 : index
    %299 = memref.load %arg5[%c2_131, %c0_132] : memref<8x8xf32, #tpu.memory_space<smem>>
    %c2_133 = arith.constant 2 : index
    %c1_134 = arith.constant 1 : index
    %300 = memref.load %arg5[%c2_133, %c1_134] : memref<8x8xf32, #tpu.memory_space<smem>>
    %c2_135 = arith.constant 2 : index
    %c2_136 = arith.constant 2 : index
    %301 = memref.load %arg5[%c2_135, %c2_136] : memref<8x8xf32, #tpu.memory_space<smem>>
    %c2_137 = arith.constant 2 : index
    %c3_138 = arith.constant 3 : index
    %302 = memref.load %arg5[%c2_137, %c3_138] : memref<8x8xf32, #tpu.memory_space<smem>>
    %c2_139 = arith.constant 2 : index
    %c4_140 = arith.constant 4 : index
    %303 = memref.load %arg5[%c2_139, %c4_140] : memref<8x8xf32, #tpu.memory_space<smem>>
    %304 = arith.mulf %297, %2 : vector<1x128xf32>
    %cst_141 = arith.constant dense<0.000000e+00> : vector<16x128xf32>
    %305 = tpu.matmul %7, %256, %cst_141 {dimension_numbers = #tpu.dot_dimension_numbers<[1], [0], [0], [1], [0, 0, 1, 1], [], []>} : vector<16x16xf32>, vector<16x128xf32>, vector<16x128xf32> -> vector<16x128xf32>
    %306 = vector.broadcast %4 : vector<16x1xf32> to vector<16x128xf32>
    %307 = vector.broadcast %304 : vector<1x128xf32> to vector<16x128xf32>
    %308 = arith.mulf %306, %307 : vector<16x128xf32>
    %309 = arith.addf %308, %305 : vector<16x128xf32>
    %310 = vector.broadcast %299 : f32 to vector<16x1xf32>
    %311 = arith.mulf %3, %310 : vector<16x1xf32>
    %312 = arith.addf %311, %5 : vector<16x1xf32>
    %313 = vector.broadcast %312 : vector<16x1xf32> to vector<16x128xf32>
    %314 = arith.addf %309, %313 : vector<16x128xf32>
    %315 = math.tanh %314 : vector<16x128xf32>
    %316 = vector.broadcast %6 : vector<16x1xf32> to vector<16x128xf32>
    %317 = arith.mulf %316, %315 : vector<16x128xf32>
    %cst_142 = arith.constant dense<0.000000e+00> : vector<128xf32>
    %318 = vector.multi_reduction <add>, %317, %cst_142 [0] : vector<16x128xf32> to vector<128xf32>
    %319 = vector.shape_cast %318 : vector<128xf32> to vector<1x128xf32>
    %320 = vector.broadcast %8 : f32 to vector<1x128xf32>
    %321 = arith.addf %319, %320 : vector<1x128xf32>
    %322 = arith.mulf %321, %297 : vector<1x128xf32>
    %323 = arith.subf %285, %322 : vector<1x128xf32>
    %cst_143 = arith.constant 0.000000e+00 : f32
    %324 = vector.broadcast %cst_143 : f32 to vector<1x128xf32>
    %325 = arith.maximumf %323, %324 : vector<1x128xf32>
    %326 = vector.broadcast %300 : f32 to vector<1x128xf32>
    %327 = arith.mulf %326, %325 : vector<1x128xf32>
    %cst_144 = arith.constant 0.000000e+00 : f32
    %328 = vector.broadcast %cst_144 : f32 to vector<1x128xf32>
    %329 = arith.minimumf %323, %328 : vector<1x128xf32>
    %330 = vector.broadcast %301 : f32 to vector<1x128xf32>
    %331 = arith.mulf %330, %329 : vector<1x128xf32>
    %332 = arith.addf %327, %331 : vector<1x128xf32>
    %cst_145 = arith.constant 0.000000e+00 : f32
    %333 = vector.broadcast %cst_145 : f32 to vector<1x128xf32>
    %334 = arith.maximumf %321, %333 : vector<1x128xf32>
    %335 = vector.broadcast %302 : f32 to vector<1x128xf32>
    %336 = arith.mulf %335, %334 : vector<1x128xf32>
    %cst_146 = arith.constant 0.000000e+00 : f32
    %337 = vector.broadcast %cst_146 : f32 to vector<1x128xf32>
    %338 = arith.minimumf %321, %337 : vector<1x128xf32>
    %339 = vector.broadcast %303 : f32 to vector<1x128xf32>
    %340 = arith.mulf %339, %338 : vector<1x128xf32>
    %341 = arith.addf %336, %340 : vector<1x128xf32>
    %342 = arith.mulf %341, %298 : vector<1x128xf32>
    %343 = arith.addf %332, %342 : vector<1x128xf32>
    %344 = arith.mulf %343, %70 : vector<1x128xf32>
    %345 = arith.subf %321, %262 : vector<1x128xf32>
    %cst_147 = arith.constant -1.000000e+01 : f32
    %346 = vector.broadcast %cst_147 : f32 to vector<1x128xf32>
    %347 = arith.mulf %346, %345 : vector<1x128xf32>
    %348 = arith.mulf %347, %345 : vector<1x128xf32>
    %349 = math.exp %348 : vector<1x128xf32>
    %cst_148 = arith.constant 1.000000e+00 : f32
    %350 = vector.broadcast %cst_148 : f32 to vector<1x128xf32>
    %351 = arith.subf %350, %349 : vector<1x128xf32>
    %cst_149 = arith.constant 1.000000e+00 : f32
    %352 = vector.broadcast %cst_149 : f32 to vector<1x128xf32>
    %353 = arith.mulf %352, %351 : vector<1x128xf32>
    %354 = arith.addf %296, %353 : vector<1x128xf32>
    %355 = arith.mulf %354, %70 : vector<1x128xf32>
    %c6_150 = arith.constant 6 : index
    %c0_151 = arith.constant 0 : index
    %356 = vector.load %arg1[%c6_150, %c0_151] : memref<16x128xf32, #tpu.memory_space<vmem>>, vector<1x128xf32>
    %c8_152 = arith.constant 8 : index
    %c0_153 = arith.constant 0 : index
    %357 = vector.load %arg1[%c8_152, %c0_153] : memref<16x128xf32, #tpu.memory_space<vmem>>, vector<1x128xf32>
    %c3_154 = arith.constant 3 : index
    %c0_155 = arith.constant 0 : index
    %358 = memref.load %arg5[%c3_154, %c0_155] : memref<8x8xf32, #tpu.memory_space<smem>>
    %c3_156 = arith.constant 3 : index
    %c1_157 = arith.constant 1 : index
    %359 = memref.load %arg5[%c3_156, %c1_157] : memref<8x8xf32, #tpu.memory_space<smem>>
    %c3_158 = arith.constant 3 : index
    %c2_159 = arith.constant 2 : index
    %360 = memref.load %arg5[%c3_158, %c2_159] : memref<8x8xf32, #tpu.memory_space<smem>>
    %c3_160 = arith.constant 3 : index
    %c3_161 = arith.constant 3 : index
    %361 = memref.load %arg5[%c3_160, %c3_161] : memref<8x8xf32, #tpu.memory_space<smem>>
    %c3_162 = arith.constant 3 : index
    %c4_163 = arith.constant 4 : index
    %362 = memref.load %arg5[%c3_162, %c4_163] : memref<8x8xf32, #tpu.memory_space<smem>>
    %363 = arith.mulf %356, %2 : vector<1x128xf32>
    %cst_164 = arith.constant dense<0.000000e+00> : vector<16x128xf32>
    %364 = tpu.matmul %7, %315, %cst_164 {dimension_numbers = #tpu.dot_dimension_numbers<[1], [0], [0], [1], [0, 0, 1, 1], [], []>} : vector<16x16xf32>, vector<16x128xf32>, vector<16x128xf32> -> vector<16x128xf32>
    %365 = vector.broadcast %4 : vector<16x1xf32> to vector<16x128xf32>
    %366 = vector.broadcast %363 : vector<1x128xf32> to vector<16x128xf32>
    %367 = arith.mulf %365, %366 : vector<16x128xf32>
    %368 = arith.addf %367, %364 : vector<16x128xf32>
    %369 = vector.broadcast %358 : f32 to vector<16x1xf32>
    %370 = arith.mulf %3, %369 : vector<16x1xf32>
    %371 = arith.addf %370, %5 : vector<16x1xf32>
    %372 = vector.broadcast %371 : vector<16x1xf32> to vector<16x128xf32>
    %373 = arith.addf %368, %372 : vector<16x128xf32>
    %374 = math.tanh %373 : vector<16x128xf32>
    %375 = vector.broadcast %6 : vector<16x1xf32> to vector<16x128xf32>
    %376 = arith.mulf %375, %374 : vector<16x128xf32>
    %cst_165 = arith.constant dense<0.000000e+00> : vector<128xf32>
    %377 = vector.multi_reduction <add>, %376, %cst_165 [0] : vector<16x128xf32> to vector<128xf32>
    %378 = vector.shape_cast %377 : vector<128xf32> to vector<1x128xf32>
    %379 = vector.broadcast %8 : f32 to vector<1x128xf32>
    %380 = arith.addf %378, %379 : vector<1x128xf32>
    %381 = arith.mulf %380, %356 : vector<1x128xf32>
    %382 = arith.subf %344, %381 : vector<1x128xf32>
    %cst_166 = arith.constant 0.000000e+00 : f32
    %383 = vector.broadcast %cst_166 : f32 to vector<1x128xf32>
    %384 = arith.maximumf %382, %383 : vector<1x128xf32>
    %385 = vector.broadcast %359 : f32 to vector<1x128xf32>
    %386 = arith.mulf %385, %384 : vector<1x128xf32>
    %cst_167 = arith.constant 0.000000e+00 : f32
    %387 = vector.broadcast %cst_167 : f32 to vector<1x128xf32>
    %388 = arith.minimumf %382, %387 : vector<1x128xf32>
    %389 = vector.broadcast %360 : f32 to vector<1x128xf32>
    %390 = arith.mulf %389, %388 : vector<1x128xf32>
    %391 = arith.addf %386, %390 : vector<1x128xf32>
    %cst_168 = arith.constant 0.000000e+00 : f32
    %392 = vector.broadcast %cst_168 : f32 to vector<1x128xf32>
    %393 = arith.maximumf %380, %392 : vector<1x128xf32>
    %394 = vector.broadcast %361 : f32 to vector<1x128xf32>
    %395 = arith.mulf %394, %393 : vector<1x128xf32>
    %cst_169 = arith.constant 0.000000e+00 : f32
    %396 = vector.broadcast %cst_169 : f32 to vector<1x128xf32>
    %397 = arith.minimumf %380, %396 : vector<1x128xf32>
    %398 = vector.broadcast %362 : f32 to vector<1x128xf32>
    %399 = arith.mulf %398, %397 : vector<1x128xf32>
    %400 = arith.addf %395, %399 : vector<1x128xf32>
    %401 = arith.mulf %400, %357 : vector<1x128xf32>
    %402 = arith.addf %391, %401 : vector<1x128xf32>
    %403 = arith.mulf %402, %93 : vector<1x128xf32>
    %404 = arith.subf %380, %321 : vector<1x128xf32>
    %cst_170 = arith.constant -1.000000e+01 : f32
    %405 = vector.broadcast %cst_170 : f32 to vector<1x128xf32>
    %406 = arith.mulf %405, %404 : vector<1x128xf32>
    %407 = arith.mulf %406, %404 : vector<1x128xf32>
    %408 = math.exp %407 : vector<1x128xf32>
    %cst_171 = arith.constant 1.000000e+00 : f32
    %409 = vector.broadcast %cst_171 : f32 to vector<1x128xf32>
    %410 = arith.subf %409, %408 : vector<1x128xf32>
    %cst_172 = arith.constant 1.000000e+00 : f32
    %411 = vector.broadcast %cst_172 : f32 to vector<1x128xf32>
    %412 = arith.mulf %411, %410 : vector<1x128xf32>
    %413 = arith.addf %355, %412 : vector<1x128xf32>
    %414 = arith.mulf %413, %93 : vector<1x128xf32>
    %c8_173 = arith.constant 8 : index
    %c0_174 = arith.constant 0 : index
    %415 = vector.load %arg1[%c8_173, %c0_174] : memref<16x128xf32, #tpu.memory_space<vmem>>, vector<1x128xf32>
    %c10_175 = arith.constant 10 : index
    %c0_176 = arith.constant 0 : index
    %416 = vector.load %arg1[%c10_175, %c0_176] : memref<16x128xf32, #tpu.memory_space<vmem>>, vector<1x128xf32>
    %c4_177 = arith.constant 4 : index
    %c0_178 = arith.constant 0 : index
    %417 = memref.load %arg5[%c4_177, %c0_178] : memref<8x8xf32, #tpu.memory_space<smem>>
    %c4_179 = arith.constant 4 : index
    %c1_180 = arith.constant 1 : index
    %418 = memref.load %arg5[%c4_179, %c1_180] : memref<8x8xf32, #tpu.memory_space<smem>>
    %c4_181 = arith.constant 4 : index
    %c2_182 = arith.constant 2 : index
    %419 = memref.load %arg5[%c4_181, %c2_182] : memref<8x8xf32, #tpu.memory_space<smem>>
    %c4_183 = arith.constant 4 : index
    %c3_184 = arith.constant 3 : index
    %420 = memref.load %arg5[%c4_183, %c3_184] : memref<8x8xf32, #tpu.memory_space<smem>>
    %c4_185 = arith.constant 4 : index
    %c4_186 = arith.constant 4 : index
    %421 = memref.load %arg5[%c4_185, %c4_186] : memref<8x8xf32, #tpu.memory_space<smem>>
    %422 = arith.mulf %415, %2 : vector<1x128xf32>
    %cst_187 = arith.constant dense<0.000000e+00> : vector<16x128xf32>
    %423 = tpu.matmul %7, %374, %cst_187 {dimension_numbers = #tpu.dot_dimension_numbers<[1], [0], [0], [1], [0, 0, 1, 1], [], []>} : vector<16x16xf32>, vector<16x128xf32>, vector<16x128xf32> -> vector<16x128xf32>
    %424 = vector.broadcast %4 : vector<16x1xf32> to vector<16x128xf32>
    %425 = vector.broadcast %422 : vector<1x128xf32> to vector<16x128xf32>
    %426 = arith.mulf %424, %425 : vector<16x128xf32>
    %427 = arith.addf %426, %423 : vector<16x128xf32>
    %428 = vector.broadcast %417 : f32 to vector<16x1xf32>
    %429 = arith.mulf %3, %428 : vector<16x1xf32>
    %430 = arith.addf %429, %5 : vector<16x1xf32>
    %431 = vector.broadcast %430 : vector<16x1xf32> to vector<16x128xf32>
    %432 = arith.addf %427, %431 : vector<16x128xf32>
    %433 = math.tanh %432 : vector<16x128xf32>
    %434 = vector.broadcast %6 : vector<16x1xf32> to vector<16x128xf32>
    %435 = arith.mulf %434, %433 : vector<16x128xf32>
    %cst_188 = arith.constant dense<0.000000e+00> : vector<128xf32>
    %436 = vector.multi_reduction <add>, %435, %cst_188 [0] : vector<16x128xf32> to vector<128xf32>
    %437 = vector.shape_cast %436 : vector<128xf32> to vector<1x128xf32>
    %438 = vector.broadcast %8 : f32 to vector<1x128xf32>
    %439 = arith.addf %437, %438 : vector<1x128xf32>
    %440 = arith.mulf %439, %415 : vector<1x128xf32>
    %441 = arith.subf %403, %440 : vector<1x128xf32>
    %cst_189 = arith.constant 0.000000e+00 : f32
    %442 = vector.broadcast %cst_189 : f32 to vector<1x128xf32>
    %443 = arith.maximumf %441, %442 : vector<1x128xf32>
    %444 = vector.broadcast %418 : f32 to vector<1x128xf32>
    %445 = arith.mulf %444, %443 : vector<1x128xf32>
    %cst_190 = arith.constant 0.000000e+00 : f32
    %446 = vector.broadcast %cst_190 : f32 to vector<1x128xf32>
    %447 = arith.minimumf %441, %446 : vector<1x128xf32>
    %448 = vector.broadcast %419 : f32 to vector<1x128xf32>
    %449 = arith.mulf %448, %447 : vector<1x128xf32>
    %450 = arith.addf %445, %449 : vector<1x128xf32>
    %cst_191 = arith.constant 0.000000e+00 : f32
    %451 = vector.broadcast %cst_191 : f32 to vector<1x128xf32>
    %452 = arith.maximumf %439, %451 : vector<1x128xf32>
    %453 = vector.broadcast %420 : f32 to vector<1x128xf32>
    %454 = arith.mulf %453, %452 : vector<1x128xf32>
    %cst_192 = arith.constant 0.000000e+00 : f32
    %455 = vector.broadcast %cst_192 : f32 to vector<1x128xf32>
    %456 = arith.minimumf %439, %455 : vector<1x128xf32>
    %457 = vector.broadcast %421 : f32 to vector<1x128xf32>
    %458 = arith.mulf %457, %456 : vector<1x128xf32>
    %459 = arith.addf %454, %458 : vector<1x128xf32>
    %460 = arith.mulf %459, %416 : vector<1x128xf32>
    %461 = arith.addf %450, %460 : vector<1x128xf32>
    %462 = arith.mulf %461, %116 : vector<1x128xf32>
    %463 = arith.subf %439, %380 : vector<1x128xf32>
    %cst_193 = arith.constant -1.000000e+01 : f32
    %464 = vector.broadcast %cst_193 : f32 to vector<1x128xf32>
    %465 = arith.mulf %464, %463 : vector<1x128xf32>
    %466 = arith.mulf %465, %463 : vector<1x128xf32>
    %467 = math.exp %466 : vector<1x128xf32>
    %cst_194 = arith.constant 1.000000e+00 : f32
    %468 = vector.broadcast %cst_194 : f32 to vector<1x128xf32>
    %469 = arith.subf %468, %467 : vector<1x128xf32>
    %cst_195 = arith.constant 1.000000e+00 : f32
    %470 = vector.broadcast %cst_195 : f32 to vector<1x128xf32>
    %471 = arith.mulf %470, %469 : vector<1x128xf32>
    %472 = arith.addf %414, %471 : vector<1x128xf32>
    %473 = arith.mulf %472, %116 : vector<1x128xf32>
    %c10_196 = arith.constant 10 : index
    %c0_197 = arith.constant 0 : index
    %474 = vector.load %arg1[%c10_196, %c0_197] : memref<16x128xf32, #tpu.memory_space<vmem>>, vector<1x128xf32>
    %c12_198 = arith.constant 12 : index
    %c0_199 = arith.constant 0 : index
    %475 = vector.load %arg1[%c12_198, %c0_199] : memref<16x128xf32, #tpu.memory_space<vmem>>, vector<1x128xf32>
    %c5_200 = arith.constant 5 : index
    %c0_201 = arith.constant 0 : index
    %476 = memref.load %arg5[%c5_200, %c0_201] : memref<8x8xf32, #tpu.memory_space<smem>>
    %c5_202 = arith.constant 5 : index
    %c1_203 = arith.constant 1 : index
    %477 = memref.load %arg5[%c5_202, %c1_203] : memref<8x8xf32, #tpu.memory_space<smem>>
    %c5_204 = arith.constant 5 : index
    %c2_205 = arith.constant 2 : index
    %478 = memref.load %arg5[%c5_204, %c2_205] : memref<8x8xf32, #tpu.memory_space<smem>>
    %c5_206 = arith.constant 5 : index
    %c3_207 = arith.constant 3 : index
    %479 = memref.load %arg5[%c5_206, %c3_207] : memref<8x8xf32, #tpu.memory_space<smem>>
    %c5_208 = arith.constant 5 : index
    %c4_209 = arith.constant 4 : index
    %480 = memref.load %arg5[%c5_208, %c4_209] : memref<8x8xf32, #tpu.memory_space<smem>>
    %481 = arith.mulf %474, %2 : vector<1x128xf32>
    %cst_210 = arith.constant dense<0.000000e+00> : vector<16x128xf32>
    %482 = tpu.matmul %7, %433, %cst_210 {dimension_numbers = #tpu.dot_dimension_numbers<[1], [0], [0], [1], [0, 0, 1, 1], [], []>} : vector<16x16xf32>, vector<16x128xf32>, vector<16x128xf32> -> vector<16x128xf32>
    %483 = vector.broadcast %4 : vector<16x1xf32> to vector<16x128xf32>
    %484 = vector.broadcast %481 : vector<1x128xf32> to vector<16x128xf32>
    %485 = arith.mulf %483, %484 : vector<16x128xf32>
    %486 = arith.addf %485, %482 : vector<16x128xf32>
    %487 = vector.broadcast %476 : f32 to vector<16x1xf32>
    %488 = arith.mulf %3, %487 : vector<16x1xf32>
    %489 = arith.addf %488, %5 : vector<16x1xf32>
    %490 = vector.broadcast %489 : vector<16x1xf32> to vector<16x128xf32>
    %491 = arith.addf %486, %490 : vector<16x128xf32>
    %492 = math.tanh %491 : vector<16x128xf32>
    %493 = vector.broadcast %6 : vector<16x1xf32> to vector<16x128xf32>
    %494 = arith.mulf %493, %492 : vector<16x128xf32>
    %cst_211 = arith.constant dense<0.000000e+00> : vector<128xf32>
    %495 = vector.multi_reduction <add>, %494, %cst_211 [0] : vector<16x128xf32> to vector<128xf32>
    %496 = vector.shape_cast %495 : vector<128xf32> to vector<1x128xf32>
    %497 = vector.broadcast %8 : f32 to vector<1x128xf32>
    %498 = arith.addf %496, %497 : vector<1x128xf32>
    %499 = arith.mulf %498, %474 : vector<1x128xf32>
    %500 = arith.subf %462, %499 : vector<1x128xf32>
    %cst_212 = arith.constant 0.000000e+00 : f32
    %501 = vector.broadcast %cst_212 : f32 to vector<1x128xf32>
    %502 = arith.maximumf %500, %501 : vector<1x128xf32>
    %503 = vector.broadcast %477 : f32 to vector<1x128xf32>
    %504 = arith.mulf %503, %502 : vector<1x128xf32>
    %cst_213 = arith.constant 0.000000e+00 : f32
    %505 = vector.broadcast %cst_213 : f32 to vector<1x128xf32>
    %506 = arith.minimumf %500, %505 : vector<1x128xf32>
    %507 = vector.broadcast %478 : f32 to vector<1x128xf32>
    %508 = arith.mulf %507, %506 : vector<1x128xf32>
    %509 = arith.addf %504, %508 : vector<1x128xf32>
    %cst_214 = arith.constant 0.000000e+00 : f32
    %510 = vector.broadcast %cst_214 : f32 to vector<1x128xf32>
    %511 = arith.maximumf %498, %510 : vector<1x128xf32>
    %512 = vector.broadcast %479 : f32 to vector<1x128xf32>
    %513 = arith.mulf %512, %511 : vector<1x128xf32>
    %cst_215 = arith.constant 0.000000e+00 : f32
    %514 = vector.broadcast %cst_215 : f32 to vector<1x128xf32>
    %515 = arith.minimumf %498, %514 : vector<1x128xf32>
    %516 = vector.broadcast %480 : f32 to vector<1x128xf32>
    %517 = arith.mulf %516, %515 : vector<1x128xf32>
    %518 = arith.addf %513, %517 : vector<1x128xf32>
    %519 = arith.mulf %518, %475 : vector<1x128xf32>
    %520 = arith.addf %509, %519 : vector<1x128xf32>
    %521 = arith.mulf %520, %139 : vector<1x128xf32>
    %522 = arith.subf %498, %439 : vector<1x128xf32>
    %cst_216 = arith.constant -1.000000e+01 : f32
    %523 = vector.broadcast %cst_216 : f32 to vector<1x128xf32>
    %524 = arith.mulf %523, %522 : vector<1x128xf32>
    %525 = arith.mulf %524, %522 : vector<1x128xf32>
    %526 = math.exp %525 : vector<1x128xf32>
    %cst_217 = arith.constant 1.000000e+00 : f32
    %527 = vector.broadcast %cst_217 : f32 to vector<1x128xf32>
    %528 = arith.subf %527, %526 : vector<1x128xf32>
    %cst_218 = arith.constant 1.000000e+00 : f32
    %529 = vector.broadcast %cst_218 : f32 to vector<1x128xf32>
    %530 = arith.mulf %529, %528 : vector<1x128xf32>
    %531 = arith.addf %473, %530 : vector<1x128xf32>
    %532 = arith.mulf %531, %139 : vector<1x128xf32>
    %c12_219 = arith.constant 12 : index
    %c0_220 = arith.constant 0 : index
    %533 = vector.load %arg1[%c12_219, %c0_220] : memref<16x128xf32, #tpu.memory_space<vmem>>, vector<1x128xf32>
    %c14_221 = arith.constant 14 : index
    %c0_222 = arith.constant 0 : index
    %534 = vector.load %arg1[%c14_221, %c0_222] : memref<16x128xf32, #tpu.memory_space<vmem>>, vector<1x128xf32>
    %c6_223 = arith.constant 6 : index
    %c0_224 = arith.constant 0 : index
    %535 = memref.load %arg5[%c6_223, %c0_224] : memref<8x8xf32, #tpu.memory_space<smem>>
    %c6_225 = arith.constant 6 : index
    %c1_226 = arith.constant 1 : index
    %536 = memref.load %arg5[%c6_225, %c1_226] : memref<8x8xf32, #tpu.memory_space<smem>>
    %c6_227 = arith.constant 6 : index
    %c2_228 = arith.constant 2 : index
    %537 = memref.load %arg5[%c6_227, %c2_228] : memref<8x8xf32, #tpu.memory_space<smem>>
    %c6_229 = arith.constant 6 : index
    %c3_230 = arith.constant 3 : index
    %538 = memref.load %arg5[%c6_229, %c3_230] : memref<8x8xf32, #tpu.memory_space<smem>>
    %c6_231 = arith.constant 6 : index
    %c4_232 = arith.constant 4 : index
    %539 = memref.load %arg5[%c6_231, %c4_232] : memref<8x8xf32, #tpu.memory_space<smem>>
    %540 = arith.mulf %533, %2 : vector<1x128xf32>
    %cst_233 = arith.constant dense<0.000000e+00> : vector<16x128xf32>
    %541 = tpu.matmul %7, %492, %cst_233 {dimension_numbers = #tpu.dot_dimension_numbers<[1], [0], [0], [1], [0, 0, 1, 1], [], []>} : vector<16x16xf32>, vector<16x128xf32>, vector<16x128xf32> -> vector<16x128xf32>
    %542 = vector.broadcast %4 : vector<16x1xf32> to vector<16x128xf32>
    %543 = vector.broadcast %540 : vector<1x128xf32> to vector<16x128xf32>
    %544 = arith.mulf %542, %543 : vector<16x128xf32>
    %545 = arith.addf %544, %541 : vector<16x128xf32>
    %546 = vector.broadcast %535 : f32 to vector<16x1xf32>
    %547 = arith.mulf %3, %546 : vector<16x1xf32>
    %548 = arith.addf %547, %5 : vector<16x1xf32>
    %549 = vector.broadcast %548 : vector<16x1xf32> to vector<16x128xf32>
    %550 = arith.addf %545, %549 : vector<16x128xf32>
    %551 = math.tanh %550 : vector<16x128xf32>
    %552 = vector.broadcast %6 : vector<16x1xf32> to vector<16x128xf32>
    %553 = arith.mulf %552, %551 : vector<16x128xf32>
    %cst_234 = arith.constant dense<0.000000e+00> : vector<128xf32>
    %554 = vector.multi_reduction <add>, %553, %cst_234 [0] : vector<16x128xf32> to vector<128xf32>
    %555 = vector.shape_cast %554 : vector<128xf32> to vector<1x128xf32>
    %556 = vector.broadcast %8 : f32 to vector<1x128xf32>
    %557 = arith.addf %555, %556 : vector<1x128xf32>
    %558 = arith.mulf %557, %533 : vector<1x128xf32>
    %559 = arith.subf %521, %558 : vector<1x128xf32>
    %cst_235 = arith.constant 0.000000e+00 : f32
    %560 = vector.broadcast %cst_235 : f32 to vector<1x128xf32>
    %561 = arith.maximumf %559, %560 : vector<1x128xf32>
    %562 = vector.broadcast %536 : f32 to vector<1x128xf32>
    %563 = arith.mulf %562, %561 : vector<1x128xf32>
    %cst_236 = arith.constant 0.000000e+00 : f32
    %564 = vector.broadcast %cst_236 : f32 to vector<1x128xf32>
    %565 = arith.minimumf %559, %564 : vector<1x128xf32>
    %566 = vector.broadcast %537 : f32 to vector<1x128xf32>
    %567 = arith.mulf %566, %565 : vector<1x128xf32>
    %568 = arith.addf %563, %567 : vector<1x128xf32>
    %cst_237 = arith.constant 0.000000e+00 : f32
    %569 = vector.broadcast %cst_237 : f32 to vector<1x128xf32>
    %570 = arith.maximumf %557, %569 : vector<1x128xf32>
    %571 = vector.broadcast %538 : f32 to vector<1x128xf32>
    %572 = arith.mulf %571, %570 : vector<1x128xf32>
    %cst_238 = arith.constant 0.000000e+00 : f32
    %573 = vector.broadcast %cst_238 : f32 to vector<1x128xf32>
    %574 = arith.minimumf %557, %573 : vector<1x128xf32>
    %575 = vector.broadcast %539 : f32 to vector<1x128xf32>
    %576 = arith.mulf %575, %574 : vector<1x128xf32>
    %577 = arith.addf %572, %576 : vector<1x128xf32>
    %578 = arith.mulf %577, %534 : vector<1x128xf32>
    %579 = arith.addf %568, %578 : vector<1x128xf32>
    %580 = arith.mulf %579, %162 : vector<1x128xf32>
    %581 = arith.subf %557, %498 : vector<1x128xf32>
    %cst_239 = arith.constant -1.000000e+01 : f32
    %582 = vector.broadcast %cst_239 : f32 to vector<1x128xf32>
    %583 = arith.mulf %582, %581 : vector<1x128xf32>
    %584 = arith.mulf %583, %581 : vector<1x128xf32>
    %585 = math.exp %584 : vector<1x128xf32>
    %cst_240 = arith.constant 1.000000e+00 : f32
    %586 = vector.broadcast %cst_240 : f32 to vector<1x128xf32>
    %587 = arith.subf %586, %585 : vector<1x128xf32>
    %cst_241 = arith.constant 1.000000e+00 : f32
    %588 = vector.broadcast %cst_241 : f32 to vector<1x128xf32>
    %589 = arith.mulf %588, %587 : vector<1x128xf32>
    %590 = arith.addf %532, %589 : vector<1x128xf32>
    %591 = arith.mulf %590, %162 : vector<1x128xf32>
    %592 = tpu.concatenate %177, %226, %285, %344, %403, %462, %521, %580 in 0 : vector<1x128xf32>, vector<1x128xf32>, vector<1x128xf32>, vector<1x128xf32>, vector<1x128xf32>, vector<1x128xf32>, vector<1x128xf32>, vector<1x128xf32> -> vector<8x128xf32>
    %c0_242 = arith.constant 0 : index
    %c0_243 = arith.constant 0 : index
    %593 = vector.load %arg8[%c0_242, %c0_243] : memref<8x128xf32, #tpu.memory_space<vmem>>, vector<8x128xf32>
    tpu.vector_store %arg8[%c0_242, %c0_243], %592 {strides = array<i32>} : memref<8x128xf32, #tpu.memory_space<vmem>>, vector<8x128xf32>,
    %594 = tpu.concatenate %178, %237, %296, %355, %414, %473, %532, %591 in 0 : vector<1x128xf32>, vector<1x128xf32>, vector<1x128xf32>, vector<1x128xf32>, vector<1x128xf32>, vector<1x128xf32>, vector<1x128xf32>, vector<1x128xf32> -> vector<8x128xf32>
    %c0_244 = arith.constant 0 : index
    %c0_245 = arith.constant 0 : index
    %595 = vector.load %arg10[%c0_244, %c0_245] : memref<8x128xf32, #tpu.memory_space<vmem>>, vector<8x128xf32>
    tpu.vector_store %arg10[%c0_244, %c0_245], %594 {strides = array<i32>} : memref<8x128xf32, #tpu.memory_space<vmem>>, vector<8x128xf32>,
    return
  }
  func.func @transform_0(%arg0: i32) -> (i32, i32) {
    %c0_i32 = arith.constant 0 : i32
    %c0_i32_0 = arith.constant 0 : i32
    return %c0_i32, %arg0 : i32, i32
  }
  func.func @transform_1(%arg0: i32) -> (i32, i32) {
    %c0_i32 = arith.constant 0 : i32
    %c0_i32_0 = arith.constant 0 : i32
    return %c0_i32, %arg0 : i32, i32
  }
  func.func @transform_2(%arg0: i32) -> (i32, i32) {
    %c0_i32 = arith.constant 0 : i32
    %c0_i32_0 = arith.constant 0 : i32
    %c0_i32_1 = arith.constant 0 : i32
    return %c0_i32, %c0_i32_0 : i32, i32
  }
  func.func @transform_3(%arg0: i32) -> (i32, i32) {
    %c0_i32 = arith.constant 0 : i32
    %c0_i32_0 = arith.constant 0 : i32
    %c0_i32_1 = arith.constant 0 : i32
    return %c0_i32, %c0_i32_0 : i32, i32
  }
  func.func @transform_4(%arg0: i32) -> (i32, i32) {
    %c0_i32 = arith.constant 0 : i32
    %c0_i32_0 = arith.constant 0 : i32
    %c0_i32_1 = arith.constant 0 : i32
    return %c0_i32, %c0_i32_0 : i32, i32
  }
  func.func @transform_5(%arg0: i32) -> (i32, i32) {
    %c0_i32 = arith.constant 0 : i32
    %c0_i32_0 = arith.constant 0 : i32
    %c0_i32_1 = arith.constant 0 : i32
    return %c0_i32, %c0_i32_0 : i32, i32
  }
  func.func @transform_6(%arg0: i32) -> (i32, i32) {
    %c0_i32 = arith.constant 0 : i32
    %c0_i32_0 = arith.constant 0 : i32
    %c0_i32_1 = arith.constant 0 : i32
    return %c0_i32, %c0_i32_0 : i32, i32
  }
  func.func @transform_7(%arg0: i32) -> (i32, i32) {
    %c0_i32 = arith.constant 0 : i32
    %c0_i32_0 = arith.constant 0 : i32
    return %c0_i32, %arg0 : i32, i32
  }
  func.func @transform_8(%arg0: i32) -> (i32, i32) {
    %c0_i32 = arith.constant 0 : i32
    %c0_i32_0 = arith.constant 0 : i32
    return %c0_i32, %arg0 : i32, i32
  }
  func.func @transform_9(%arg0: i32) -> (i32, i32) {
    %c0_i32 = arith.constant 0 : i32
    %c0_i32_0 = arith.constant 0 : i32
    return %c0_i32, %arg0 : i32, i32
  }
}

</mosaic_0001>

<llo_original>
// kernel: tpu_custom_call.1
$region0: #{tpu_custom_call.1}
  #allocation0 [shape = 'u32[]', space=smem, size = 0x4, offset = 0x4, fixed_abs, tag = 'smem constant byte address 0x4 - core index']
  #allocation1 [shape = 'u32[72,128]{1,0:T(1,128)}', space=vmem, size = 0x9000, scoped, tag = 'internal scratch']
  #allocation2 [shape = 'f32[8,128]{1,0:T(8,128)}', space=vmem, size = 0x1000, scoped, tag = 'scratch operand']
  %s0 = inlined_call_operand.vmem [shape: f32[16,128], index: 0, kind: input, shape index: {}]
  %s1 = inlined_call_operand.vmem [shape: f32[1,128], index: 1, kind: input, shape index: {}]
  %s2 = inlined_call_operand.vmem [shape: f32[16,1], index: 2, kind: input, shape index: {}]
  %s3 = inlined_call_operand.vmem [shape: f32[8,2], index: 3, kind: input, shape index: {}]
  %s4 = inlined_call_operand.vmem [shape: f32[8,8], index: 4, kind: input, shape index: {}]
  %s5 = inlined_call_operand.vmem [shape: f32[16,4], index: 5, kind: input, shape index: {}]
  %s6 = inlined_call_operand.vmem [shape: f32[16,16], index: 6, kind: input, shape index: {}]
  %s7 = inlined_call_operand.hbm [shape: f32[8,128], index: 7, kind: output, shape index: {0}]
  %s8 = inlined_call_operand.hbm [shape: f32[8,128], index: 8, kind: output, shape index: {1}]
  %s9 = inlined_call_operand.hbm [shape: f32[8,128], index: 9, kind: output, shape index: {2}]
  %10 = xla_tuple %s7, %s8, %s9
  %s11 = sld [smem:[#allocation0]]
  $region58: #{tpu_custom_call.1} parent=0
    _
  %s13 = ssub.s32 1, %s11
  %s14 = scalar_select 0, %s13, %s11
  $region1: #{tpu_custom_call.1} parent=0
    #allocation3 [shape = 'u8[4096]{0}', space=smem, size = 0x1000, scoped, tag = 'input window, operand 4, single buffered']
    #allocation4 [shape = 's32[1]{0}', space=sflag, size = 0x4, scoped, tag = 'scoped memory for tpu_custom_call.1']
    #allocation5 [shape = 's32[1]{0}', space=sflag, size = 0x4, scoped, tag = 'scoped memory for tpu_custom_call.1']
    #allocation6 [shape = 'u8[4096]{0}', space=vmem, size = 0x1000, scoped, tag = 'output window, operand 0, single buffered']
    #allocation7 [shape = 'u8[4096]{0}', space=vmem, size = 0x1000, scoped, tag = 'output window, operand 1, single buffered']
    #allocation8 [shape = 's32[1]{0}', space=sflag, size = 0x4, scoped, tag = 'scoped memory for tpu_custom_call.1']
    #allocation9 [shape = 'u8[4096]{0}', space=vmem, size = 0x1000, scoped, tag = 'output window, operand 2, single buffered']
    %15 = vsyncpa [#allocation5], 0
    %16 = vsyncpa [#allocation4], 0
    %17 = vsyncpa [#allocation8], 0
    // Predicated region
    $region2: #{tpu_custom_call.1} parent=1 // pred_check
      _
    $region3: #{tpu_custom_call.1} parent=1 // pred_check_branch
      %19 = sbr.rel (0) target = $region5
    $region4: #{tpu_custom_call.1} parent=1 // pred_region
      _
    $region5: #{tpu_custom_call.1} parent=1 // pred_fallthru
      _
    // Predicated region
    $region6: #{tpu_custom_call.1} parent=1 // pred_check
      _
    $region7: #{tpu_custom_call.1} parent=1 // pred_check_branch
      %21 = sbr.rel (0) target = $region9
    $region8: #{tpu_custom_call.1} parent=1 // pred_region
      _
    $region9: #{tpu_custom_call.1} parent=1 // pred_fallthru
      _
    // Predicated region
    $region10: #{tpu_custom_call.1} parent=1 // pred_check
      _
    $region11: #{tpu_custom_call.1} parent=1 // pred_check_branch
      %23 = sbr.rel (0) target = $region13
    $region12: #{tpu_custom_call.1} parent=1 // pred_region
      _
    $region13: #{tpu_custom_call.1} parent=1 // pred_fallthru
      _
    // Predicated region
    $region14: #{tpu_custom_call.1} parent=1 // pred_check
      _
    $region15: #{tpu_custom_call.1} parent=1 // pred_check_branch
      %25 = sbr.rel (0) target = $region17
    $region16: #{tpu_custom_call.1} parent=1 // pred_region
      _
    $region17: #{tpu_custom_call.1} parent=1 // pred_fallthru
      _
    // Predicated region
    $region18: #{tpu_custom_call.1} parent=1 // pred_check
      _
    $region19: #{tpu_custom_call.1} parent=1 // pred_check_branch
      %27 = sbr.rel (0) target = $region21
    $region20: #{tpu_custom_call.1} parent=1 // pred_region
      %29 = vsyncadd [#allocation5], 0
      %s31 = sshll.u32 %s4, 4
      %s32 = int_to_ptr.vmem [resolvable:$true] %s31
      %34 = dma.vmem_to_smem %s32, 128, [#allocation3], [#allocation5]
    $region21: #{tpu_custom_call.1} parent=1 // pred_fallthru
      _
    // Predicated region
    $region22: #{tpu_custom_call.1} parent=1 // pred_check
      _
    $region23: #{tpu_custom_call.1} parent=1 // pred_check_branch
      %36 = sbr.rel (0) target = $region25
    $region24: #{tpu_custom_call.1} parent=1 // pred_region
      _
    $region25: #{tpu_custom_call.1} parent=1 // pred_fallthru
      _
    // Predicated region
    $region26: #{tpu_custom_call.1} parent=1 // pred_check
      _
    $region27: #{tpu_custom_call.1} parent=1 // pred_check_branch
      %38 = sbr.rel (0) target = $region29
    $region28: #{tpu_custom_call.1} parent=1 // pred_region
      _
    $region29: #{tpu_custom_call.1} parent=1 // pred_fallthru
      _
    // Predicated region
    $region30: #{tpu_custom_call.1} parent=1 // pred_check
      _
    $region31: #{tpu_custom_call.1} parent=1 // pred_check_branch
      %40 = sbr.rel (0) target = $region33
    $region32: #{tpu_custom_call.1} parent=1 // pred_region
      %42 = dma.done [#allocation5], 128
    $region33: #{tpu_custom_call.1} parent=1 // pred_fallthru
      _
    %43 = sfence
    %v44 = vld [vmem:[%s1] sm:$0x1]
    %v45 = vrcp.pop %v44
    %v46 = vmul.f32 %v44, %v45
    %v47 = vsub.f32 1.0, %v46
    %v48 = vmul.f32 %v45, %v47
    %v49 = vadd.f32 %v45, %v48
    %vm50 = vweird.f32 %v44
    %vm51 = vweird.f32 %v45
    %vm52 = vmor %vm50, %vm51
    %v53 = vsel %vm52, %v45, %v49
    %v54 = vand.u32 2147483647, %v44
    %vm55 = vcmp.eq.f32.partialorder %v54, 8.507059e+37
    %v56 = vand.u32 %v44, 2147483648
    %v57 = vor.u32 1.1754944e-38, %v56
    %v58 = vsel %vm55, %v57, %v53
    %v59 = vmul.f32 1.0, %v58
    %v60 = vld [vmem:[%s5] sm:$0xff]
    %v61 = vld [vmem:[%s5 + $0x8] sm:$0xff]
    %v62 = vld [vmem:[%s6] sm:$0xff]
    %v63 = vld [vmem:[%s6 + $0x8] sm:$0xff]
    %s64 = sld [smem:[#allocation3 + $0x5]]
    %s65 = sld [smem:[#allocation3 + $0x6]]
    %v66 = vstv %s65
    %v67 = vld [vmem:[%s0] sm:$0x3]
    %v68 = vld [vmem:[%s2] sm:$0x3]
    %70 = vset.pattern.permute.xlu0 0
    %71 = vperm.xlu0 %70, %v68
    %v72 = vpop.permute.xlu0 %71
    %v75 = vperm.slane %v44, 0
    %v77 = vmul.f32 %v72, %v75
    %vm78 = vcmp.le.f32.partialorder %v67, %v77
    %v79 = vsel %vm78, 1, 0
    %v80 = vcvt.s32.f32 %v79
    %vm81 = vcmask 1041408
    %v82 = vsel %vm81, %v80, -inf
    %v83 = vrot.slane %v82, 4
    %v84 = vmax.f32 %v82, %v83
    %v85 = vrot.slane %v84, 2
    %v86 = vmax.f32 %v84, %v85
    %v87 = vrot.slane %v86, 1
    %v88 = vmax.f32 %v86, %v87
    %v89 = vmax.f32 %v88, 0.0
    %v90 = vsub.f32 1.0, %v89
    %v91 = vld [vmem:[%s3 + $0x1] sm:$0x1]
    %v92 = vld [vmem:[%s0 + $0x2] sm:$0x1]
    %94 = vset.pattern.permute.xlu0 0
    %95 = vperm.xlu0 %94, %v91
    %v96 = vpop.permute.xlu0 %95
    %v98 = vmul.f32 %v92, %v96
    %99 = vset.pattern.permute.xlu0 1
    %100 = vperm.xlu0 %99, %v91
    %v101 = vpop.permute.xlu0 %100
    %v103 = vmul.f32 %v44, %v101
    %v104 = vsub.f32 %v98, %v103
    %v105 = vmul.f32 %v104, %v90
    %v106 = vld [vmem:[%s0 + $0x2] sm:$0x3]
    %v107 = vld [vmem:[%s2 + $0x2] sm:$0x3]
    %109 = vset.pattern.permute.xlu0 0
    %110 = vperm.xlu0 %109, %v107
    %v111 = vpop.permute.xlu0 %110
    %v113 = vmul.f32 %v111, %v75
    %vm114 = vcmp.le.f32.partialorder %v106, %v113
    %v115 = vsel %vm114, 1, 0
    %v116 = vcvt.s32.f32 %v115
    %v117 = vsel %vm81, %v116, -inf
    %v118 = vrot.slane %v117, 4
    %v119 = vmax.f32 %v117, %v118
    %v120 = vrot.slane %v119, 2
    %v121 = vmax.f32 %v119, %v120
    %v122 = vrot.slane %v121, 1
    %v123 = vmax.f32 %v121, %v122
    %v124 = vmax.f32 %v89, %v123
    %v125 = vsub.f32 1.0, %v124
    %v126 = vld [vmem:[%s3 + $0x2] sm:$0x1]
    %v127 = vld [vmem:[%s0 + $0x4] sm:$0x1]
    %129 = vset.pattern.permute.xlu0 0
    %130 = vperm.xlu0 %129, %v126
    %v131 = vpop.permute.xlu0 %130
    %v133 = vmul.f32 %v127, %v131
    %134 = vset.pattern.permute.xlu0 1
    %135 = vperm.xlu0 %134, %v126
    %v136 = vpop.permute.xlu0 %135
    %v138 = vmul.f32 %v44, %v136
    %v139 = vsub.f32 %v133, %v138
    %v140 = vmul.f32 %v139, %v125
    %v141 = vld [vmem:[%s0 + $0x4] sm:$0x3]
    %v142 = vld [vmem:[%s2 + $0x4] sm:$0x3]
    %144 = vset.pattern.permute.xlu0 0
    %145 = vperm.xlu0 %144, %v142
    %v146 = vpop.permute.xlu0 %145
    %v148 = vmul.f32 %v146, %v75
    %vm149 = vcmp.le.f32.partialorder %v141, %v148
    %v150 = vsel %vm149, 1, 0
    %v151 = vcvt.s32.f32 %v150
    %v152 = vsel %vm81, %v151, -inf
    %v153 = vrot.slane %v152, 4
    %v154 = vmax.f32 %v152, %v153
    %v155 = vrot.slane %v154, 2
    %v156 = vmax.f32 %v154, %v155
    %v157 = vrot.slane %v156, 1
    %v158 = vmax.f32 %v156, %v157
    %v159 = vmax.f32 %v124, %v158
    %v160 = vsub.f32 1.0, %v159
    %v161 = vld [vmem:[%s3 + $0x3] sm:$0x1]
    %v162 = vld [vmem:[%s0 + $0x6] sm:$0x1]
    %164 = vset.pattern.permute.xlu0 0
    %165 = vperm.xlu0 %164, %v161
    %v166 = vpop.permute.xlu0 %165
    %v168 = vmul.f32 %v162, %v166
    %169 = vset.pattern.permute.xlu0 1
    %170 = vperm.xlu0 %169, %v161
    %v171 = vpop.permute.xlu0 %170
    %v173 = vmul.f32 %v44, %v171
    %v174 = vsub.f32 %v168, %v173
    %v175 = vmul.f32 %v174, %v160
    %v176 = vld [vmem:[%s0 + $0x6] sm:$0x3]
    %v177 = vld [vmem:[%s2 + $0x6] sm:$0x3]
    %179 = vset.pattern.permute.xlu0 0
    %180 = vperm.xlu0 %179, %v177
    %v181 = vpop.permute.xlu0 %180
    %v183 = vmul.f32 %v181, %v75
    %vm184 = vcmp.le.f32.partialorder %v176, %v183
    %v185 = vsel %vm184, 1, 0
    %v186 = vcvt.s32.f32 %v185
    %v187 = vsel %vm81, %v186, -inf
    %v188 = vrot.slane %v187, 4
    %v189 = vmax.f32 %v187, %v188
    %v190 = vrot.slane %v189, 2
    %v191 = vmax.f32 %v189, %v190
    %v192 = vrot.slane %v191, 1
    %v193 = vmax.f32 %v191, %v192
    %v194 = vmax.f32 %v159, %v193
    %v195 = vsub.f32 1.0, %v194
    %v196 = vld [vmem:[%s3 + $0x4] sm:$0x1]
    %v197 = vld [vmem:[%s0 + $0x8] sm:$0x1]
    %199 = vset.pattern.permute.xlu0 0
    %200 = vperm.xlu0 %199, %v196
    %v201 = vpop.permute.xlu0 %200
    %v203 = vmul.f32 %v197, %v201
    %204 = vset.pattern.permute.xlu0 1
    %205 = vperm.xlu0 %204, %v196
    %v206 = vpop.permute.xlu0 %205
    %v208 = vmul.f32 %v44, %v206
    %v209 = vsub.f32 %v203, %v208
    %v210 = vmul.f32 %v209, %v195
    %v211 = vld [vmem:[%s0 + $0x8] sm:$0x3]
    %v212 = vld [vmem:[%s2 + $0x8] sm:$0x3]
    %214 = vset.pattern.permute.xlu0 0
    %215 = vperm.xlu0 %214, %v212
    %v216 = vpop.permute.xlu0 %215
    %v218 = vmul.f32 %v216, %v75
    %vm219 = vcmp.le.f32.partialorder %v211, %v218
    %v220 = vsel %vm219, 1, 0
    %v221 = vcvt.s32.f32 %v220
    %v222 = vsel %vm81, %v221, -inf
    %v223 = vrot.slane %v222, 4
    %v224 = vmax.f32 %v222, %v223
    %v225 = vrot.slane %v224, 2
    %v226 = vmax.f32 %v224, %v225
    %v227 = vrot.slane %v226, 1
    %v228 = vmax.f32 %v226, %v227
    %v229 = vmax.f32 %v194, %v228
    %v230 = vsub.f32 1.0, %v229
    %v231 = vld [vmem:[%s3 + $0x5] sm:$0x1]
    %v232 = vld [vmem:[%s0 + $0xa] sm:$0x1]
    %234 = vset.pattern.permute.xlu0 0
    %235 = vperm.xlu0 %234, %v231
    %v236 = vpop.permute.xlu0 %235
    %v238 = vmul.f32 %v232, %v236
    %239 = vset.pattern.permute.xlu0 1
    %240 = vperm.xlu0 %239, %v231
    %v241 = vpop.permute.xlu0 %240
    %v243 = vmul.f32 %v44, %v241
    %v244 = vsub.f32 %v238, %v243
    %v245 = vmul.f32 %v244, %v230
    %v246 = vld [vmem:[%s0 + $0xa] sm:$0x3]
    %v247 = vld [vmem:[%s2 + $0xa] sm:$0x3]
    %249 = vset.pattern.permute.xlu0 0
    %250 = vperm.xlu0 %249, %v247
    %v251 = vpop.permute.xlu0 %250
    %v253 = vmul.f32 %v251, %v75
    %vm254 = vcmp.le.f32.partialorder %v246, %v253
    %v255 = vsel %vm254, 1, 0
    %v256 = vcvt.s32.f32 %v255
    %v257 = vsel %vm81, %v256, -inf
    %v258 = vrot.slane %v257, 4
    %v259 = vmax.f32 %v257, %v258
    %v260 = vrot.slane %v259, 2
    %v261 = vmax.f32 %v259, %v260
    %v262 = vrot.slane %v261, 1
    %v263 = vmax.f32 %v261, %v262
    %v264 = vmax.f32 %v229, %v263
    %v265 = vsub.f32 1.0, %v264
    %v266 = vld [vmem:[%s3 + $0x6] sm:$0x1]
    %v267 = vld [vmem:[%s0 + $0xc] sm:$0x1]
    %269 = vset.pattern.permute.xlu0 0
    %270 = vperm.xlu0 %269, %v266
    %v271 = vpop.permute.xlu0 %270
    %v273 = vmul.f32 %v267, %v271
    %274 = vset.pattern.permute.xlu0 1
    %275 = vperm.xlu0 %274, %v266
    %v276 = vpop.permute.xlu0 %275
    %v278 = vmul.f32 %v44, %v276
    %v279 = vsub.f32 %v273, %v278
    %v280 = vmul.f32 %v279, %v265
    %v281 = vld [vmem:[%s0 + $0xc] sm:$0x3]
    %v282 = vld [vmem:[%s2 + $0xc] sm:$0x3]
    %284 = vset.pattern.permute.xlu0 0
    %285 = vperm.xlu0 %284, %v282
    %v286 = vpop.permute.xlu0 %285
    %v288 = vmul.f32 %v286, %v75
    %vm289 = vcmp.le.f32.partialorder %v281, %v288
    %v290 = vsel %vm289, 1, 0
    %v291 = vcvt.s32.f32 %v290
    %v292 = vsel %vm81, %v291, -inf
    %v293 = vrot.slane %v292, 4
    %v294 = vmax.f32 %v292, %v293
    %v295 = vrot.slane %v294, 2
    %v296 = vmax.f32 %v294, %v295
    %v297 = vrot.slane %v296, 1
    %v298 = vmax.f32 %v296, %v297
    %v299 = vmax.f32 %v264, %v298
    %v300 = vsub.f32 1.0, %v299
    %v301 = vld [vmem:[%s3 + $0x7] sm:$0x1]
    %v302 = vld [vmem:[%s0 + $0xe] sm:$0x1]
    %304 = vset.pattern.permute.xlu0 0
    %305 = vperm.xlu0 %304, %v301
    %v306 = vpop.permute.xlu0 %305
    %v308 = vmul.f32 %v302, %v306
    %309 = vset.pattern.permute.xlu0 1
    %310 = vperm.xlu0 %309, %v301
    %v311 = vpop.permute.xlu0 %310
    %v313 = vmul.f32 %v44, %v311
    %v314 = vsub.f32 %v308, %v313
    %v315 = vmul.f32 %v314, %v300
    %v317 = vrot.slane %v105, 7
    %v320 = vrot.slane %v140, 6
    %v323 = vrot.slane %v175, 5
    %v326 = vrot.slane %v210, 4
    %v329 = vrot.slane %v245, 3
    %v332 = vrot.slane %v280, 2
    %v335 = vrot.slane %v315, 1
    %vm337 = vcmask 1040384
    %v338 = vsel %vm337, %v66, %v317
    %v339 = vsel %vm81, %v338, %v320
    %vm340 = vcmask 1042432
    %v341 = vsel %vm340, %v339, %v323
    %vm342 = vcmask 1043456
    %v343 = vsel %vm342, %v341, %v326
    %vm344 = vcmask 1044480
    %v345 = vsel %vm344, %v343, %v329
    %vm346 = vcmask 1045504
    %v347 = vsel %vm346, %v345, %v332
    %vm348 = vcmask 1046528
    %v349 = vsel %vm348, %v347, %v335
    %350 = vst [vmem:[#allocation7] sm:$0xff] %v349
    %v351 = vld [vmem:[%s0] sm:$0x1]
    %v352 = vld [vmem:[%s0 + $0x2] sm:$0x1]
    %s353 = sld [smem:[#allocation3]]
    %s354 = sld [smem:[#allocation3 + $0x1]]
    %s355 = sld [smem:[#allocation3 + $0x2]]
    %s356 = sld [smem:[#allocation3 + $0x3]]
    %s357 = sld [smem:[#allocation3 + $0x4]]
    %v358 = vmul.f32 %v351, %v59
    %vm359 = vcmask 130048
    %v361 = vsel %vm359, %v62, 0
    %v364 = vsel %vm359, %v63, 0
    %366 = vmatpush.msra.mxu0 0.0
    %367 = vmatpush.msra.mxu0 0.0
    %368 = vmatpush.msra.mxu0 0.0
    %369 = vmatpush.msra.mxu0 0.0
    %370 = vmatpush.msra.mxu0 0.0
    %371 = vmatpush.msra.mxu0 0.0
    %372 = vmatpush.msra.mxu0 0.0
    %373 = vmatpush.msra.mxu0 0.0
    %374 = vmatpush.msra.mxu0 0.0
    %375 = vmatpush.msra.mxu0 0.0
    %376 = vmatpush.msra.mxu0 0.0
    %377 = vmatpush.msra.mxu0 0.0
    %378 = vmatpush.msra.mxu0 0.0
    %379 = vmatpush.msra.mxu0 0.0
    %380 = vmatpush.msra.mxu0 0.0
    %381 = vmatpush.msra.mxu0 0.0
    %382 = vmatmul.f32.gmra.mxu0 %v361
    %v383 = vpop.f32.mrf.mxu0
    %v384 = vadd.f32 0.0, %v383
    %385 = vmatmul.f32.gmra.mxu0 %v364
    %v386 = vpop.f32.mrf.mxu0
    %v387 = vadd.f32 0.0, %v386
    %388 = vdwg.mxu0
    %390 = vset.pattern.permute.xlu0 1
    %391 = vperm.xlu0 %390, %v60
    %v392 = vpop.permute.xlu0 %391
    %395 = vset.pattern.permute.xlu0 1
    %396 = vperm.xlu0 %395, %v61
    %v397 = vpop.permute.xlu0 %396
    %v399 = vperm.slane %v358, 0
    %v400 = vmul.f32 %v392, %v399
    %v401 = vmul.f32 %v397, %v399
    %v402 = vadd.f32 %v400, %v384
    %v403 = vadd.f32 %v401, %v387
    %v404 = vstv %s353
    %v405 = vmul.f32 %v60, %v404
    %v406 = vmul.f32 %v61, %v404
    %407 = vrot.lane.b32.xlu0 %v60, 126
    %v408 = vpop.permute.xlu0 %407
    %409 = vrot.lane.b32.xlu0 %v61, 126
    %v410 = vpop.permute.xlu0 %409
    %v413 = vadd.f32 %v405, %v408
    %v414 = vadd.f32 %v406, %v410
    %416 = vset.pattern.permute.xlu0 0
    %417 = vperm.xlu0 %416, %v413
    %v418 = vpop.permute.xlu0 %417
    %421 = vset.pattern.permute.xlu0 0
    %422 = vperm.xlu0 %421, %v414
    %v423 = vpop.permute.xlu0 %422
    %v425 = vadd.f32 %v402, %v418
    %v426 = vadd.f32 %v403, %v423
    %v427 = vtanh.pop %v425
    %v428 = vtanh.pop %v426
    %429 = vset.pattern.permute.xlu0 3
    %430 = vperm.xlu0 %429, %v60
    %v431 = vpop.permute.xlu0 %430
    %433 = vset.pattern.permute.xlu0 3
    %434 = vperm.xlu0 %433, %v61
    %v435 = vpop.permute.xlu0 %434
    %v437 = vmul.f32 %v431, %v427
    %v438 = vmul.f32 %v435, %v428
    %v439 = vadd.f32 %v437, %v438
    %v440 = vrot.slane %v439, 4
    %v441 = vadd.f32 %v439, %v440
    %v442 = vrot.slane %v441, 2
    %v443 = vadd.f32 %v441, %v442
    %v444 = vrot.slane %v443, 1
    %v445 = vadd.f32 %v443, %v444
    %v446 = vstv %s64
    %v447 = vadd.f32 %v445, %v446
    %v448 = vmul.f32 %v447, %v351
    %v449 = vsub.f32 1000.0, %v448
    %v450 = vmax.f32 %v449, 0.0
    %v451 = vstv %s354
    %v452 = vmul.f32 %v451, %v450
    %v453 = vmin.f32 %v449, 0.0
    %v454 = vstv %s355
    %v455 = vmul.f32 %v454, %v453
    %v456 = vadd.f32 %v452, %v455
    %v457 = vmax.f32 %v447, 0.0
    %v458 = vstv %s356
    %v459 = vmul.f32 %v458, %v457
    %v460 = vmin.f32 %v447, 0.0
    %v461 = vstv %s357
    %v462 = vmul.f32 %v461, %v460
    %v463 = vadd.f32 %v459, %v462
    %v464 = vmul.f32 %v463, %v352
    %v465 = vadd.f32 %v456, %v464
    %v466 = vmul.f32 %v465, %v90
    %v467 = vmul.f32 %v447, -10.0
    %v468 = vmul.f32 %v467, %v447
    %v469 = vmul.f32 %v468, 1.442695
    %v470 = vpow.pop %v469
    %v471 = vsub.f32 1.0, %v470
    %v472 = vadd.f32 %v471, 0.0
    %v473 = vmul.f32 %v472, %v90
    %v474 = vld [vmem:[%s0 + $0x4] sm:$0x1]
    %s475 = sld [smem:[#allocation3 + $0x80]]
    %s476 = sld [smem:[#allocation3 + $0x81]]
    %s477 = sld [smem:[#allocation3 + $0x82]]
    %s478 = sld [smem:[#allocation3 + $0x83]]
    %s479 = sld [smem:[#allocation3 + $0x84]]
    %v480 = vmul.f32 %v352, %v59
    %481 = vmatpush.msra.mxu0 0.0
    %482 = vmatpush.msra.mxu0 0.0
    %483 = vmatpush.msra.mxu0 0.0
    %484 = vmatpush.msra.mxu0 0.0
    %485 = vmatpush.msra.mxu0 0.0
    %486 = vmatpush.msra.mxu0 0.0
    %487 = vmatpush.msra.mxu0 0.0
    %488 = vmatpush.msra.mxu0 0.0
    %489 = vmatpush.msra.mxu0 0.0
    %490 = vmatpush.msra.mxu0 0.0
    %491 = vmatpush.msra.mxu0 0.0
    %492 = vmatpush.msra.mxu0 0.0
    %493 = vmatpush.msra.mxu0 0.0
    %494 = vmatpush.msra.mxu0 0.0
    %495 = vmatpush.msra.mxu0 %v428
    %496 = vmatpush.msra.mxu0 %v427
    %497 = vmatmul.f32.gmra.mxu0 %v361
    %v498 = vpop.f32.mrf.mxu0
    %v499 = vadd.f32 0.0, %v498
    %500 = vmatmul.f32.gmra.mxu0 %v364
    %v501 = vpop.f32.mrf.mxu0
    %v502 = vadd.f32 0.0, %v501
    %503 = vdwg.mxu0
    %v504 = vperm.slane %v480, 0
    %v505 = vmul.f32 %v392, %v504
    %v506 = vmul.f32 %v397, %v504
    %v507 = vadd.f32 %v505, %v499
    %v508 = vadd.f32 %v506, %v502
    %v509 = vstv %s475
    %v510 = vmul.f32 %v60, %v509
    %v511 = vmul.f32 %v61, %v509
    %v512 = vadd.f32 %v510, %v408
    %v513 = vadd.f32 %v511, %v410
    %515 = vset.pattern.permute.xlu0 0
    %516 = vperm.xlu0 %515, %v512
    %v517 = vpop.permute.xlu0 %516
    %520 = vset.pattern.permute.xlu0 0
    %521 = vperm.xlu0 %520, %v513
    %v522 = vpop.permute.xlu0 %521
    %v524 = vadd.f32 %v507, %v517
    %v525 = vadd.f32 %v508, %v522
    %v526 = vtanh.pop %v524
    %v527 = vtanh.pop %v525
    %v528 = vmul.f32 %v431, %v526
    %v529 = vmul.f32 %v435, %v527
    %v530 = vadd.f32 %v528, %v529
    %v531 = vrot.slane %v530, 4
    %v532 = vadd.f32 %v530, %v531
    %v533 = vrot.slane %v532, 2
    %v534 = vadd.f32 %v532, %v533
    %v535 = vrot.slane %v534, 1
    %v536 = vadd.f32 %v534, %v535
    %v537 = vadd.f32 %v536, %v446
    %v538 = vmul.f32 %v537, %v352
    %v539 = vsub.f32 %v466, %v538
    %v540 = vmax.f32 %v539, 0.0
    %v541 = vstv %s476
    %v542 = vmul.f32 %v541, %v540
    %v543 = vmin.f32 %v539, 0.0
    %v544 = vstv %s477
    %v545 = vmul.f32 %v544, %v543
    %v546 = vadd.f32 %v542, %v545
    %v547 = vmax.f32 %v537, 0.0
    %v548 = vstv %s478
    %v549 = vmul.f32 %v548, %v547
    %v550 = vmin.f32 %v537, 0.0
    %v551 = vstv %s479
    %v552 = vmul.f32 %v551, %v550
    %v553 = vadd.f32 %v549, %v552
    %v554 = vmul.f32 %v553, %v474
    %v555 = vadd.f32 %v546, %v554
    %v556 = vmul.f32 %v555, %v125
    %v557 = vsub.f32 %v537, %v447
    %v558 = vmul.f32 %v557, -10.0
    %v559 = vmul.f32 %v558, %v557
    %v560 = vmul.f32 %v559, 1.442695
    %v561 = vpow.pop %v560
    %v562 = vsub.f32 1.0, %v561
    %v563 = vadd.f32 %v473, %v562
    %v564 = vmul.f32 %v563, %v125
    %v565 = vld [vmem:[%s0 + $0x6] sm:$0x1]
    %s566 = sld [smem:[#allocation3 + $0x100]]
    %s567 = sld [smem:[#allocation3 + $0x101]]
    %s568 = sld [smem:[#allocation3 + $0x102]]
    %s569 = sld [smem:[#allocation3 + $0x103]]
    %s570 = sld [smem:[#allocation3 + $0x104]]
    %v571 = vmul.f32 %v474, %v59
    %572 = vmatpush.msra.mxu0 0.0
    %573 = vmatpush.msra.mxu0 0.0
    %574 = vmatpush.msra.mxu0 0.0
    %575 = vmatpush.msra.mxu0 0.0
    %576 = vmatpush.msra.mxu0 0.0
    %577 = vmatpush.msra.mxu0 0.0
    %578 = vmatpush.msra.mxu0 0.0
    %579 = vmatpush.msra.mxu0 0.0
    %580 = vmatpush.msra.mxu0 0.0
    %581 = vmatpush.msra.mxu0 0.0
    %582 = vmatpush.msra.mxu0 0.0
    %583 = vmatpush.msra.mxu0 0.0
    %584 = vmatpush.msra.mxu0 0.0
    %585 = vmatpush.msra.mxu0 0.0
    %586 = vmatpush.msra.mxu0 %v527
    %587 = vmatpush.msra.mxu0 %v526
    %588 = vmatmul.f32.gmra.mxu0 %v361
    %v589 = vpop.f32.mrf.mxu0
    %v590 = vadd.f32 0.0, %v589
    %591 = vmatmul.f32.gmra.mxu0 %v364
    %v592 = vpop.f32.mrf.mxu0
    %v593 = vadd.f32 0.0, %v592
    %594 = vdwg.mxu0
    %v595 = vperm.slane %v571, 0
    %v596 = vmul.f32 %v392, %v595
    %v597 = vmul.f32 %v397, %v595
    %v598 = vadd.f32 %v596, %v590
    %v599 = vadd.f32 %v597, %v593
    %v600 = vstv %s566
    %v601 = vmul.f32 %v60, %v600
    %v602 = vmul.f32 %v61, %v600
    %v603 = vadd.f32 %v601, %v408
    %v604 = vadd.f32 %v602, %v410
    %606 = vset.pattern.permute.xlu0 0
    %607 = vperm.xlu0 %606, %v603
    %v608 = vpop.permute.xlu0 %607
    %611 = vset.pattern.permute.xlu0 0
    %612 = vperm.xlu0 %611, %v604
    %v613 = vpop.permute.xlu0 %612
    %v615 = vadd.f32 %v598, %v608
    %v616 = vadd.f32 %v599, %v613
    %v617 = vtanh.pop %v615
    %v618 = vtanh.pop %v616
    %v619 = vmul.f32 %v431, %v617
    %v620 = vmul.f32 %v435, %v618
    %v621 = vadd.f32 %v619, %v620
    %v622 = vrot.slane %v621, 4
    %v623 = vadd.f32 %v621, %v622
    %v624 = vrot.slane %v623, 2
    %v625 = vadd.f32 %v623, %v624
    %v626 = vrot.slane %v625, 1
    %v627 = vadd.f32 %v625, %v626
    %v628 = vadd.f32 %v627, %v446
    %v629 = vmul.f32 %v628, %v474
    %v630 = vsub.f32 %v556, %v629
    %v631 = vmax.f32 %v630, 0.0
    %v632 = vstv %s567
    %v633 = vmul.f32 %v632, %v631
    %v634 = vmin.f32 %v630, 0.0
    %v635 = vstv %s568
    %v636 = vmul.f32 %v635, %v634
    %v637 = vadd.f32 %v633, %v636
    %v638 = vmax.f32 %v628, 0.0
    %v639 = vstv %s569
    %v640 = vmul.f32 %v639, %v638
    %v641 = vmin.f32 %v628, 0.0
    %v642 = vstv %s570
    %v643 = vmul.f32 %v642, %v641
    %v644 = vadd.f32 %v640, %v643
    %v645 = vmul.f32 %v644, %v565
    %v646 = vadd.f32 %v637, %v645
    %v647 = vmul.f32 %v646, %v160
    %v648 = vsub.f32 %v628, %v537
    %v649 = vmul.f32 %v648, -10.0
    %v650 = vmul.f32 %v649, %v648
    %v651 = vmul.f32 %v650, 1.442695
    %v652 = vpow.pop %v651
    %v653 = vsub.f32 1.0, %v652
    %v654 = vadd.f32 %v564, %v653
    %v655 = vmul.f32 %v654, %v160
    %v656 = vld [vmem:[%s0 + $0x8] sm:$0x1]
    %s657 = sld [smem:[#allocation3 + $0x180]]
    %s658 = sld [smem:[#allocation3 + $0x181]]
    %s659 = sld [smem:[#allocation3 + $0x182]]
    %s660 = sld [smem:[#allocation3 + $0x183]]
    %s661 = sld [smem:[#allocation3 + $0x184]]
    %v662 = vmul.f32 %v565, %v59
    %663 = vmatpush.msra.mxu0 0.0
    %664 = vmatpush.msra.mxu0 0.0
    %665 = vmatpush.msra.mxu0 0.0
    %666 = vmatpush.msra.mxu0 0.0
    %667 = vmatpush.msra.mxu0 0.0
    %668 = vmatpush.msra.mxu0 0.0
    %669 = vmatpush.msra.mxu0 0.0
    %670 = vmatpush.msra.mxu0 0.0
    %671 = vmatpush.msra.mxu0 0.0
    %672 = vmatpush.msra.mxu0 0.0
    %673 = vmatpush.msra.mxu0 0.0
    %674 = vmatpush.msra.mxu0 0.0
    %675 = vmatpush.msra.mxu0 0.0
    %676 = vmatpush.msra.mxu0 0.0
    %677 = vmatpush.msra.mxu0 %v618
    %678 = vmatpush.msra.mxu0 %v617
    %679 = vmatmul.f32.gmra.mxu0 %v361
    %v680 = vpop.f32.mrf.mxu0
    %v681 = vadd.f32 0.0, %v680
    %682 = vmatmul.f32.gmra.mxu0 %v364
    %v683 = vpop.f32.mrf.mxu0
    %v684 = vadd.f32 0.0, %v683
    %685 = vdwg.mxu0
    %v686 = vperm.slane %v662, 0
    %v687 = vmul.f32 %v392, %v686
    %v688 = vmul.f32 %v397, %v686
    %v689 = vadd.f32 %v687, %v681
    %v690 = vadd.f32 %v688, %v684
    %v691 = vstv %s657
    %v692 = vmul.f32 %v60, %v691
    %v693 = vmul.f32 %v61, %v691
    %v694 = vadd.f32 %v692, %v408
    %v695 = vadd.f32 %v693, %v410
    %697 = vset.pattern.permute.xlu0 0
    %698 = vperm.xlu0 %697, %v694
    %v699 = vpop.permute.xlu0 %698
    %702 = vset.pattern.permute.xlu0 0
    %703 = vperm.xlu0 %702, %v695
    %v704 = vpop.permute.xlu0 %703
    %v706 = vadd.f32 %v689, %v699
    %v707 = vadd.f32 %v690, %v704
    %v708 = vtanh.pop %v706
    %v709 = vtanh.pop %v707
    %v710 = vmul.f32 %v431, %v708
    %v711 = vmul.f32 %v435, %v709
    %v712 = vadd.f32 %v710, %v711
    %v713 = vrot.slane %v712, 4
    %v714 = vadd.f32 %v712, %v713
    %v715 = vrot.slane %v714, 2
    %v716 = vadd.f32 %v714, %v715
    %v717 = vrot.slane %v716, 1
    %v718 = vadd.f32 %v716, %v717
    %v719 = vadd.f32 %v718, %v446
    %v720 = vmul.f32 %v719, %v565
    %v721 = vsub.f32 %v647, %v720
    %v722 = vmax.f32 %v721, 0.0
    %v723 = vstv %s658
    %v724 = vmul.f32 %v723, %v722
    %v725 = vmin.f32 %v721, 0.0
    %v726 = vstv %s659
    %v727 = vmul.f32 %v726, %v725
    %v728 = vadd.f32 %v724, %v727
    %v729 = vmax.f32 %v719, 0.0
    %v730 = vstv %s660
    %v731 = vmul.f32 %v730, %v729
    %v732 = vmin.f32 %v719, 0.0
    %v733 = vstv %s661
    %v734 = vmul.f32 %v733, %v732
    %v735 = vadd.f32 %v731, %v734
    %v736 = vmul.f32 %v735, %v656
    %v737 = vadd.f32 %v728, %v736
    %v738 = vmul.f32 %v737, %v195
    %v739 = vsub.f32 %v719, %v628
    %v740 = vmul.f32 %v739, -10.0
    %v741 = vmul.f32 %v740, %v739
    %v742 = vmul.f32 %v741, 1.442695
    %v743 = vpow.pop %v742
    %v744 = vsub.f32 1.0, %v743
    %v745 = vadd.f32 %v655, %v744
    %v746 = vmul.f32 %v745, %v195
    %v747 = vld [vmem:[%s0 + $0xa] sm:$0x1]
    %s748 = sld [smem:[#allocation3 + $0x200]]
    %s749 = sld [smem:[#allocation3 + $0x201]]
    %s750 = sld [smem:[#allocation3 + $0x202]]
    %s751 = sld [smem:[#allocation3 + $0x203]]
    %s752 = sld [smem:[#allocation3 + $0x204]]
    %v753 = vmul.f32 %v656, %v59
    %754 = vmatpush.msra.mxu0 0.0
    %755 = vmatpush.msra.mxu0 0.0
    %756 = vmatpush.msra.mxu0 0.0
    %757 = vmatpush.msra.mxu0 0.0
    %758 = vmatpush.msra.mxu0 0.0
    %759 = vmatpush.msra.mxu0 0.0
    %760 = vmatpush.msra.mxu0 0.0
    %761 = vmatpush.msra.mxu0 0.0
    %762 = vmatpush.msra.mxu0 0.0
    %763 = vmatpush.msra.mxu0 0.0
    %764 = vmatpush.msra.mxu0 0.0
    %765 = vmatpush.msra.mxu0 0.0
    %766 = vmatpush.msra.mxu0 0.0
    %767 = vmatpush.msra.mxu0 0.0
    %768 = vmatpush.msra.mxu0 %v709
    %769 = vmatpush.msra.mxu0 %v708
    %770 = vmatmul.f32.gmra.mxu0 %v361
    %v771 = vpop.f32.mrf.mxu0
    %v772 = vadd.f32 0.0, %v771
    %773 = vmatmul.f32.gmra.mxu0 %v364
    %v774 = vpop.f32.mrf.mxu0
    %v775 = vadd.f32 0.0, %v774
    %776 = vdwg.mxu0
    %v777 = vperm.slane %v753, 0
    %v778 = vmul.f32 %v392, %v777
    %v779 = vmul.f32 %v397, %v777
    %v780 = vadd.f32 %v778, %v772
    %v781 = vadd.f32 %v779, %v775
    %v782 = vstv %s748
    %v783 = vmul.f32 %v60, %v782
    %v784 = vmul.f32 %v61, %v782
    %v785 = vadd.f32 %v783, %v408
    %v786 = vadd.f32 %v784, %v410
    %788 = vset.pattern.permute.xlu0 0
    %789 = vperm.xlu0 %788, %v785
    %v790 = vpop.permute.xlu0 %789
    %793 = vset.pattern.permute.xlu0 0
    %794 = vperm.xlu0 %793, %v786
    %v795 = vpop.permute.xlu0 %794
    %v797 = vadd.f32 %v780, %v790
    %v798 = vadd.f32 %v781, %v795
    %v799 = vtanh.pop %v797
    %v800 = vtanh.pop %v798
    %v801 = vmul.f32 %v431, %v799
    %v802 = vmul.f32 %v435, %v800
    %v803 = vadd.f32 %v801, %v802
    %v804 = vrot.slane %v803, 4
    %v805 = vadd.f32 %v803, %v804
    %v806 = vrot.slane %v805, 2
    %v807 = vadd.f32 %v805, %v806
    %v808 = vrot.slane %v807, 1
    %v809 = vadd.f32 %v807, %v808
    %v810 = vadd.f32 %v809, %v446
    %v811 = vmul.f32 %v810, %v656
    %v812 = vsub.f32 %v738, %v811
    %v813 = vmax.f32 %v812, 0.0
    %v814 = vstv %s749
    %v815 = vmul.f32 %v814, %v813
    %v816 = vmin.f32 %v812, 0.0
    %v817 = vstv %s750
    %v818 = vmul.f32 %v817, %v816
    %v819 = vadd.f32 %v815, %v818
    %v820 = vmax.f32 %v810, 0.0
    %v821 = vstv %s751
    %v822 = vmul.f32 %v821, %v820
    %v823 = vmin.f32 %v810, 0.0
    %v824 = vstv %s752
    %v825 = vmul.f32 %v824, %v823
    %v826 = vadd.f32 %v822, %v825
    %v827 = vmul.f32 %v826, %v747
    %v828 = vadd.f32 %v819, %v827
    %v829 = vmul.f32 %v828, %v230
    %v830 = vsub.f32 %v810, %v719
    %v831 = vmul.f32 %v830, -10.0
    %v832 = vmul.f32 %v831, %v830
    %v833 = vmul.f32 %v832, 1.442695
    %v834 = vpow.pop %v833
    %v835 = vsub.f32 1.0, %v834
    %v836 = vadd.f32 %v746, %v835
    %v837 = vmul.f32 %v836, %v230
    %v838 = vld [vmem:[%s0 + $0xc] sm:$0x1]
    %s839 = sld [smem:[#allocation3 + $0x280]]
    %s840 = sld [smem:[#allocation3 + $0x281]]
    %s841 = sld [smem:[#allocation3 + $0x282]]
    %s842 = sld [smem:[#allocation3 + $0x283]]
    %s843 = sld [smem:[#allocation3 + $0x284]]
    %v844 = vmul.f32 %v747, %v59
    %845 = vmatpush.msra.mxu0 0.0
    %846 = vmatpush.msra.mxu0 0.0
    %847 = vmatpush.msra.mxu0 0.0
    %848 = vmatpush.msra.mxu0 0.0
    %849 = vmatpush.msra.mxu0 0.0
    %850 = vmatpush.msra.mxu0 0.0
    %851 = vmatpush.msra.mxu0 0.0
    %852 = vmatpush.msra.mxu0 0.0
    %853 = vmatpush.msra.mxu0 0.0
    %854 = vmatpush.msra.mxu0 0.0
    %855 = vmatpush.msra.mxu0 0.0
    %856 = vmatpush.msra.mxu0 0.0
    %857 = vmatpush.msra.mxu0 0.0
    %858 = vmatpush.msra.mxu0 0.0
    %859 = vmatpush.msra.mxu0 %v800
    %860 = vmatpush.msra.mxu0 %v799
    %861 = vmatmul.f32.gmra.mxu0 %v361
    %v862 = vpop.f32.mrf.mxu0
    %v863 = vadd.f32 0.0, %v862
    %864 = vmatmul.f32.gmra.mxu0 %v364
    %v865 = vpop.f32.mrf.mxu0
    %v866 = vadd.f32 0.0, %v865
    %867 = vdwg.mxu0
    %v868 = vperm.slane %v844, 0
    %v869 = vmul.f32 %v392, %v868
    %v870 = vmul.f32 %v397, %v868
    %v871 = vadd.f32 %v869, %v863
    %v872 = vadd.f32 %v870, %v866
    %v873 = vstv %s839
    %v874 = vmul.f32 %v60, %v873
    %v875 = vmul.f32 %v61, %v873
    %v876 = vadd.f32 %v874, %v408
    %v877 = vadd.f32 %v875, %v410
    %879 = vset.pattern.permute.xlu0 0
    %880 = vperm.xlu0 %879, %v876
    %v881 = vpop.permute.xlu0 %880
    %884 = vset.pattern.permute.xlu0 0
    %885 = vperm.xlu0 %884, %v877
    %v886 = vpop.permute.xlu0 %885
    %v888 = vadd.f32 %v871, %v881
    %v889 = vadd.f32 %v872, %v886
    %v890 = vtanh.pop %v888
    %v891 = vtanh.pop %v889
    %v892 = vmul.f32 %v431, %v890
    %v893 = vmul.f32 %v435, %v891
    %v894 = vadd.f32 %v892, %v893
    %v895 = vrot.slane %v894, 4
    %v896 = vadd.f32 %v894, %v895
    %v897 = vrot.slane %v896, 2
    %v898 = vadd.f32 %v896, %v897
    %v899 = vrot.slane %v898, 1
    %v900 = vadd.f32 %v898, %v899
    %v901 = vadd.f32 %v900, %v446
    %v902 = vmul.f32 %v901, %v747
    %v903 = vsub.f32 %v829, %v902
    %v904 = vmax.f32 %v903, 0.0
    %v905 = vstv %s840
    %v906 = vmul.f32 %v905, %v904
    %v907 = vmin.f32 %v903, 0.0
    %v908 = vstv %s841
    %v909 = vmul.f32 %v908, %v907
    %v910 = vadd.f32 %v906, %v909
    %v911 = vmax.f32 %v901, 0.0
    %v912 = vstv %s842
    %v913 = vmul.f32 %v912, %v911
    %v914 = vmin.f32 %v901, 0.0
    %v915 = vstv %s843
    %v916 = vmul.f32 %v915, %v914
    %v917 = vadd.f32 %v913, %v916
    %v918 = vmul.f32 %v917, %v838
    %v919 = vadd.f32 %v910, %v918
    %v920 = vmul.f32 %v919, %v265
    %v921 = vsub.f32 %v901, %v810
    %v922 = vmul.f32 %v921, -10.0
    %v923 = vmul.f32 %v922, %v921
    %v924 = vmul.f32 %v923, 1.442695
    %v925 = vpow.pop %v924
    %v926 = vsub.f32 1.0, %v925
    %v927 = vadd.f32 %v837, %v926
    %v928 = vmul.f32 %v927, %v265
    %v929 = vld [vmem:[%s0 + $0xe] sm:$0x1]
    %s930 = sld [smem:[#allocation3 + $0x300]]
    %s931 = sld [smem:[#allocation3 + $0x301]]
    %s932 = sld [smem:[#allocation3 + $0x302]]
    %s933 = sld [smem:[#allocation3 + $0x303]]
    %s934 = sld [smem:[#allocation3 + $0x304]]
    %v935 = vmul.f32 %v838, %v59
    %936 = vmatpush.msra.mxu0 0.0
    %937 = vmatpush.msra.mxu0 0.0
    %938 = vmatpush.msra.mxu0 0.0
    %939 = vmatpush.msra.mxu0 0.0
    %940 = vmatpush.msra.mxu0 0.0
    %941 = vmatpush.msra.mxu0 0.0
    %942 = vmatpush.msra.mxu0 0.0
    %943 = vmatpush.msra.mxu0 0.0
    %944 = vmatpush.msra.mxu0 0.0
    %945 = vmatpush.msra.mxu0 0.0
    %946 = vmatpush.msra.mxu0 0.0
    %947 = vmatpush.msra.mxu0 0.0
    %948 = vmatpush.msra.mxu0 0.0
    %949 = vmatpush.msra.mxu0 0.0
    %950 = vmatpush.msra.mxu0 %v891
    %951 = vmatpush.msra.mxu0 %v890
    %952 = vmatmul.f32.gmra.mxu0 %v361
    %v953 = vpop.f32.mrf.mxu0
    %v954 = vadd.f32 0.0, %v953
    %955 = vmatmul.f32.gmra.mxu0 %v364
    %v956 = vpop.f32.mrf.mxu0
    %v957 = vadd.f32 0.0, %v956
    %958 = vdwg.mxu0
    %v959 = vperm.slane %v935, 0
    %v960 = vmul.f32 %v392, %v959
    %v961 = vmul.f32 %v397, %v959
    %v962 = vadd.f32 %v960, %v954
    %v963 = vadd.f32 %v961, %v957
    %v964 = vstv %s930
    %v965 = vmul.f32 %v60, %v964
    %v966 = vmul.f32 %v61, %v964
    %v967 = vadd.f32 %v965, %v408
    %v968 = vadd.f32 %v966, %v410
    %970 = vset.pattern.permute.xlu0 0
    %971 = vperm.xlu0 %970, %v967
    %v972 = vpop.permute.xlu0 %971
    %975 = vset.pattern.permute.xlu0 0
    %976 = vperm.xlu0 %975, %v968
    %v977 = vpop.permute.xlu0 %976
    %v979 = vadd.f32 %v962, %v972
    %v980 = vadd.f32 %v963, %v977
    %v981 = vtanh.pop %v979
    %v982 = vtanh.pop %v980
    %v983 = vmul.f32 %v431, %v981
    %v984 = vmul.f32 %v435, %v982
    %v985 = vadd.f32 %v983, %v984
    %v986 = vrot.slane %v985, 4
    %v987 = vadd.f32 %v985, %v986
    %v988 = vrot.slane %v987, 2
    %v989 = vadd.f32 %v987, %v988
    %v990 = vrot.slane %v989, 1
    %v991 = vadd.f32 %v989, %v990
    %v992 = vadd.f32 %v991, %v446
    %v993 = vmul.f32 %v992, %v838
    %v994 = vsub.f32 %v920, %v993
    %v995 = vmax.f32 %v994, 0.0
    %v996 = vstv %s931
    %v997 = vmul.f32 %v996, %v995
    %v998 = vmin.f32 %v994, 0.0
    %v999 = vstv %s932
    %v1000 = vmul.f32 %v999, %v998
    %v1001 = vadd.f32 %v997, %v1000
    %v1002 = vmax.f32 %v992, 0.0
    %v1003 = vstv %s933
    %v1004 = vmul.f32 %v1003, %v1002
    %v1005 = vmin.f32 %v992, 0.0
    %v1006 = vstv %s934
    %v1007 = vmul.f32 %v1006, %v1005
    %v1008 = vadd.f32 %v1004, %v1007
    %v1009 = vmul.f32 %v1008, %v929
    %v1010 = vadd.f32 %v1001, %v1009
    %v1011 = vmul.f32 %v1010, %v300
    %v1012 = vsub.f32 %v992, %v901
    %v1013 = vmul.f32 %v1012, -10.0
    %v1014 = vmul.f32 %v1013, %v1012
    %v1015 = vmul.f32 %v1014, 1.442695
    %v1016 = vpow.pop %v1015
    %v1017 = vsub.f32 1.0, %v1016
    %v1018 = vadd.f32 %v928, %v1017
    %v1019 = vmul.f32 %v1018, %v300
    %v1021 = vrot.slane %v466, 7
    %v1024 = vrot.slane %v556, 6
    %v1027 = vrot.slane %v647, 5
    %v1030 = vrot.slane %v738, 4
    %v1033 = vrot.slane %v829, 3
    %v1036 = vrot.slane %v920, 2
    %v1039 = vrot.slane %v1011, 1
    %v1041 = vsel %vm337, 1000.0, %v1021
    %v1042 = vsel %vm81, %v1041, %v1024
    %v1043 = vsel %vm340, %v1042, %v1027
    %v1044 = vsel %vm342, %v1043, %v1030
    %v1045 = vsel %vm344, %v1044, %v1033
    %v1046 = vsel %vm346, %v1045, %v1036
    %v1047 = vsel %vm348, %v1046, %v1039
    %1048 = vst [vmem:[#allocation6] sm:$0xff] %v1047
    %v1049 = vsel %vm337, 0.0, %v473
    %v1050 = vsel %vm81, %v1049, %v564
    %v1051 = vsel %vm340, %v1050, %v655
    %v1052 = vsel %vm342, %v1051, %v746
    %v1053 = vsel %vm344, %v1052, %v837
    %v1054 = vsel %vm346, %v1053, %v928
    %v1055 = vsel %vm348, %v1054, %v1019
    %1056 = vst [vmem:[#allocation9] sm:$0xff] %v1055
    // Predicated region
    $region34: #{tpu_custom_call.1} parent=1 // pred_check
      _
    $region35: #{tpu_custom_call.1} parent=1 // pred_check_branch
      %1058 = sbr.rel (0) target = $region37
    $region36: #{tpu_custom_call.1} parent=1 // pred_region
      %1060 = vsyncadd [#allocation4], 0
      %s1062 = sshll.u32 [#allocation6], 4
      %s1063 = int_to_ptr.vmem [resolvable:$true] %s1062
      %s1064 = sshll.u32 %s7, 4
      %s1065 = int_to_ptr.hbm [resolvable:$true] %s1064
      %1067 = dma.vmem_to_hbm [thread:$0]  %s1063, 128, %s1065, [#allocation4]
    $region37: #{tpu_custom_call.1} parent=1 // pred_fallthru
      _
    // Predicated region
    $region38: #{tpu_custom_call.1} parent=1 // pred_check
      _
    $region39: #{tpu_custom_call.1} parent=1 // pred_check_branch
      %1069 = sbr.rel (0) target = $region41
    $region40: #{tpu_custom_call.1} parent=1 // pred_region
      %1071 = vsyncadd [#allocation8], 0
      %s1073 = sshll.u32 [#allocation7], 4
      %s1074 = int_to_ptr.vmem [resolvable:$true] %s1073
      %s1075 = sshll.u32 %s8, 4
      %s1076 = int_to_ptr.hbm [resolvable:$true] %s1075
      %1078 = dma.vmem_to_hbm [thread:$0]  %s1074, 128, %s1076, [#allocation8]
    $region41: #{tpu_custom_call.1} parent=1 // pred_fallthru
      _
    // Predicated region
    $region42: #{tpu_custom_call.1} parent=1 // pred_check
      _
    $region43: #{tpu_custom_call.1} parent=1 // pred_check_branch
      %1080 = sbr.rel (0) target = $region45
    $region44: #{tpu_custom_call.1} parent=1 // pred_region
      %1082 = vsyncadd [#allocation8], 0
      %s1084 = sshll.u32 [#allocation9], 4
      %s1085 = int_to_ptr.vmem [resolvable:$true] %s1084
      %s1086 = sshll.u32 %s9, 4
      %s1087 = int_to_ptr.hbm [resolvable:$true] %s1086
      %1089 = dma.vmem_to_hbm [thread:$0]  %s1085, 128, %s1087, [#allocation8]
    $region45: #{tpu_custom_call.1} parent=1 // pred_fallthru
      _
    // Predicated region
    $region46: #{tpu_custom_call.1} parent=1 // pred_check
      _
    $region47: #{tpu_custom_call.1} parent=1 // pred_check_branch
      %1091 = sbr.rel (0) target = $region49
    $region48: #{tpu_custom_call.1} parent=1 // pred_region
      %1093 = dma.done [#allocation4], 128
    $region49: #{tpu_custom_call.1} parent=1 // pred_fallthru
      _
    // Predicated region
    $region50: #{tpu_custom_call.1} parent=1 // pred_check
      _
    $region51: #{tpu_custom_call.1} parent=1 // pred_check_branch
      %1095 = sbr.rel (0) target = $region53
    $region52: #{tpu_custom_call.1} parent=1 // pred_region
      %1097 = dma.done [#allocation8], 128
    $region53: #{tpu_custom_call.1} parent=1 // pred_fallthru
      _
    // Predicated region
    $region54: #{tpu_custom_call.1} parent=1 // pred_check
      _
    $region55: #{tpu_custom_call.1} parent=1 // pred_check_branch
      %1099 = sbr.rel (0) target = $region57
    $region56: #{tpu_custom_call.1} parent=1 // pred_region
      %1101 = dma.done [#allocation8], 128
    $region57: #{tpu_custom_call.1} parent=1 // pred_fallthru
      _
    %1102 = vsyncpa [#allocation4], 1
    %1103 = vsyncpa [#allocation8], 1
    %1104 = vsyncpa [#allocation5], 1

</llo_original>
